<compile_context>
chip_gen: v7x
topology: tpu7x:2x2x1
jax: 0.10.0
libtpu: 0.0.40
codegen_flags: <defaults>
</compile_context>

<pallas_src>
import functools

import jax
import jax.numpy as jnp
import numpy as np
from jax.experimental import pallas as pl
from jax.experimental.pallas import tpu as pltpu

# ---- static config (one CBAM block; small test sizes, same structure as the
#      model's CBAM(64/128/256/512) blocks) -----------------------------------
C = 32                  # input_channels
RED = 16                # reduction_ratio
CH = max(C // RED, 1)   # hidden width of the channel-attention MLP
H = W = 16
HW = H * W              # 256 -> lane-dense last axis (multiple of 128)
K = 7
PAD = 3
BN_EPS = 1e-5


def cbam_kernel(x_ref, w1t_ref, b1_ref, w2t_ref, b2_ref,
                tavg_ref, tmax_ref, bnsh_ref, o_ref):
    x = x_ref[...].astype(jnp.float32)                    # (BB, C, HW)
    bb = x.shape[0]

    # ---------------- Channel attention ---------------------------------------
    avg = jnp.mean(x, axis=-1)                             # (BB, C)
    mx = jnp.max(x, axis=-1)                               # (BB, C)
    # Stack the two pooled statistics so the tiny MLP runs as ONE pair of MXU
    # dots for the whole block instead of four low-occupancy ones.
    pooled = jnp.concatenate([avg, mx], axis=0)            # (2*BB, C)
    h1 = jnp.dot(pooled, w1t_ref[...],
                 preferred_element_type=jnp.float32) + b1_ref[...]
    h1 = jnp.maximum(h1, 0.0)                              # (2*BB, CH)
    o2 = jnp.dot(h1, w2t_ref[...],
                 preferred_element_type=jnp.float32) + b2_ref[...]   # (2*BB, C)
    ca = jax.nn.sigmoid(o2[:bb] + o2[bb:])                 # (BB, C)

    xs = x * ca[:, :, None]                                # (BB, C, HW)

    # ---------------- Spatial attention ----------------------------------------
    avg_s = jnp.mean(xs, axis=1)                           # (BB, HW)
    max_s = jnp.max(xs, axis=1)                            # (BB, HW)
    # Stage xs through the output buffer: the full-block f32 temp does not need
    # to stay live while the spatial branch runs.
    o_ref[...] = xs.astype(o_ref.dtype)

    # 7x7 conv (+ eval-mode BN scale folded into T_avg/T_max) as two MXU matmuls.
    conv = (jnp.dot(avg_s, tavg_ref[...], preferred_element_type=jnp.float32)
            + jnp.dot(max_s, tmax_ref[...], preferred_element_type=jnp.float32))
    sa = jax.nn.sigmoid(conv + bnsh_ref[...])              # (BB, HW)

    o_ref[...] = (o_ref[...].astype(jnp.float32) * sa[:, None, :]).astype(o_ref.dtype)


def _conv_toeplitz(wconv, h, w, pad):
    """Fold Conv2d(2, 1, k, k, padding=pad, bias=False) weights into two
    (h*w, h*w) matrices T_avg, T_max such that
    conv(cat([avg, max]))_flat == avg_flat @ T_avg + max_flat @ T_max.
    Zero padding is encoded by leaving out-of-range taps as zeros."""
    wconv = np.asarray(jax.device_get(wconv), np.float32)  # (2, K, K)
    k = wconv.shape[-1]
    hw = h * w
    t = np.zeros((2, hw, hw), np.float32)
    for c in range(2):
        for dy in range(k):
            for dx in range(k):
                v = wconv[c, dy, dx]
                for oy in range(h):
                    iy = oy + dy - pad
                    if iy < 0 or iy >= h:
                        continue
                    for ox in range(w):
                        ix = ox + dx - pad
                        if ix < 0 or ix >= w:
                            continue
                        t[c, iy * w + ix, oy * w + ox] = v
    return t[0], t[1]


def prepare_cbam_params(w1, b1, w2, b2, wconv, *, h=H, w=W, pad=PAD,
                        bn_gamma=1.0, bn_beta=0.0, bn_mean=0.0, bn_var=1.0,
                        bn_eps=BN_EPS):
    """One-time, host-side parameter folding (hoisted out of the jitted forward):
    transposed MLP weights, conv -> Toeplitz matrices with the eval-mode BN scale
    folded in, and the BN shift as a (1, 1) array."""
    # TODO(synk): training-mode BatchNorm (batch statistics over N*H*W) would need
    # a cross-batch reduction pass; only eval-mode running-stat BN is folded here.
    bn_scale = float(bn_gamma) / float(np.sqrt(float(bn_var) + bn_eps))
    bn_shift = float(bn_beta) - float(bn_mean) * bn_scale
    t_avg, t_max = _conv_toeplitz(wconv, h, w, pad)
    return (jnp.asarray(w1, jnp.float32).T,                # (C, CH)
            jnp.asarray(b1, jnp.float32).reshape(1, -1),   # (1, CH)
            jnp.asarray(w2, jnp.float32).T,                # (CH, C)
            jnp.asarray(b2, jnp.float32).reshape(1, -1),   # (1, C)
            jnp.asarray(t_avg * bn_scale, jnp.float32),    # (HW, HW)
            jnp.asarray(t_max * bn_scale, jnp.float32),    # (HW, HW)
            jnp.full((1, 1), bn_shift, jnp.float32))       # BN shift


@functools.partial(jax.jit, static_argnames=("block_b",))
def cbam(x, params, *, block_b=128):
    """x: (B, C, H, W), f32 or bf16 (bf16 halves HBM traffic; in-kernel math is
    f32 either way).  params: output of prepare_cbam_params().
    block_b: images per grid step (sweep 128-256 on v5e/v6e; <=128 on v7x)."""
    w1t, b1r, w2t, b2r, t_avg, t_max, bn_shift = params
    B, c, h, w = x.shape
    hw = h * w
    ch = w1t.shape[1]
    bb = min(block_b, B)
    num_blocks = -(-B // bb)
    Bp = num_blocks * bb

    xf = x.reshape(B, c, hw)                               # lane-dense layout
    if Bp != B:
        xf = jnp.pad(xf, ((0, Bp - B), (0, 0), (0, 0)))

    # VMEM budget co-tuned with block_b: double-buffered in+out blocks, ~2
    # block-sized f32 live temps, double-buffered constants; clamped well under
    # physical VMEM (128 MiB v5e/v6e, 64 MiB v7x per TC).
    itemsize = jnp.dtype(x.dtype).itemsize
    io_block = bb * c * hw * itemsize
    f32_block = bb * c * hw * 4
    const_bytes = (2 * hw * hw + 2 * c * ch + c + ch + 1) * 4
    vmem_limit = int(4 * io_block + 2 * f32_block + 2 * const_bytes + 2 * 2**20)
    vmem_limit = max(32 * 2**20, min(vmem_limit, 100 * 2**20))

    cost = pl.CostEstimate(
        flops=int(Bp * (4 * hw * hw + 10 * c * hw + 8 * c * ch)),
        transcendentals=int(Bp * (2 * c + hw)),
        bytes_accessed=int(2 * Bp * c * hw * itemsize + const_bytes),
    )

    out = pl.pallas_call(
        cbam_kernel,
        out_shape=jax.ShapeDtypeStruct((Bp, c, hw), x.dtype),
        grid=(num_blocks,),
        in_specs=[
            pl.BlockSpec((bb, c, hw), lambda g: (g, 0, 0)),   # x block
            # Constant operands: block index never changes -> DMA'd once.
            # (v7x: add pipeline_mode=pl.Buffered(1) here if VMEM gets tight.)
            pl.BlockSpec((c, ch), lambda g: (0, 0)),          # W1^T
            pl.BlockSpec((1, ch), lambda g: (0, 0)),          # b1
            pl.BlockSpec((ch, c), lambda g: (0, 0)),          # W2^T
            pl.BlockSpec((1, c), lambda g: (0, 0)),           # b2
            pl.BlockSpec((hw, hw), lambda g: (0, 0)),         # T_avg (BN-scaled)
            pl.BlockSpec((hw, hw), lambda g: (0, 0)),         # T_max (BN-scaled)
            pl.BlockSpec((1, 1), lambda g: (0, 0)),           # BN shift
        ],
        out_specs=pl.BlockSpec((bb, c, hw), lambda g: (g, 0, 0)),
        compiler_params=pltpu.CompilerParams(
            dimension_semantics=("parallel",),   # batch axis -> megacore sharding
            vmem_limit_bytes=vmem_limit,
        ),
        cost_estimate=cost,
    )(xf, w1t, b1r, w2t, b2r, t_avg, t_max, bn_shift)

    return out[:B].reshape(B, c, h, w)


# ---------------- pure-JAX reference for correctness check --------------------
def cbam_ref(x, w1, b1, w2, b2, wconv, bn_gamma=1.0, bn_beta=0.0,
             bn_mean=0.0, bn_var=1.0, bn_eps=BN_EPS):
    avg = jnp.mean(x, axis=(2, 3))           # (B, C)
    mx = jnp.max(x, axis=(2, 3))             # (B, C)

    def mlp(v):
        h = jnp.maximum(v @ w1.T + b1, 0.0)
        return h @ w2.T + b2

    ca = jax.nn.sigmoid(mlp(avg) + mlp(mx))                 # (B, C)
    xs = x * ca[:, :, None, None]
    avg_s = jnp.mean(xs, axis=1, keepdims=True)
    max_s = jnp.max(xs, axis=1, keepdims=True)
    inp = jnp.concatenate([avg_s, max_s], axis=1)           # (B, 2, H, W)
    wc = wconv.reshape(1, 2, K, K)
    conv = jax.lax.conv_general_dilated(
        inp, wc, window_strides=(1, 1),
        padding=((PAD, PAD), (PAD, PAD)),
        dimension_numbers=('NCHW', 'OIHW', 'NCHW'))
    scale = bn_gamma / jnp.sqrt(bn_var + bn_eps)
    bn = conv * scale + (bn_beta - bn_mean * scale)
    return xs * jax.nn.sigmoid(bn)


if __name__ == "__main__":
    B = 6                                    # exercises padding + a 2-step grid
    key = jax.random.PRNGKey(0)
    x = jax.random.normal(key, (B, C, H, W), dtype=jnp.float32)

    # deterministic synthetic parameters (PyTorch layouts)
    pkey = jax.random.PRNGKey(42)
    k1, k2, k3, k4, k5 = jax.random.split(pkey, 5)
    w1 = 0.1 * jax.random.normal(k1, (CH, C), dtype=jnp.float32)      # Linear(C, C//r).weight
    b1 = 0.1 * jax.random.normal(k2, (CH,), dtype=jnp.float32)        # Linear(C, C//r).bias
    w2 = 0.1 * jax.random.normal(k3, (C, CH), dtype=jnp.float32)      # Linear(C//r, C).weight
    b2 = 0.1 * jax.random.normal(k4, (C,), dtype=jnp.float32)         # Linear(C//r, C).bias
    wconv = 0.1 * jax.random.normal(k5, (2, K, K), dtype=jnp.float32) # Conv2d(2,1,7), no bias

    params = prepare_cbam_params(w1, b1, w2, b2, wconv)

    # f32 path (strict check)
    out = jax.block_until_ready(cbam(x, params, block_b=4))
    ref = jax.block_until_ready(cbam_ref(x, w1, b1, w2, b2, wconv))
    np.testing.assert_allclose(np.asarray(out), np.asarray(ref),
                               rtol=1e-4, atol=1e-4)

    # bf16 I/O path (halves HBM traffic on this bandwidth-bound kernel)
    xb = x.astype(jnp.bfloat16)
    out_bf = jax.block_until_ready(cbam(xb, params, block_b=4))
    ref_bf = jax.block_until_ready(
        cbam_ref(xb.astype(jnp.float32), w1, b1, w2, b2, wconv))
    np.testing.assert_allclose(np.asarray(out_bf, dtype=np.float32),
                               np.asarray(ref_bf), rtol=0.1, atol=0.1)

    print("KERNEL_OK")
</pallas_src>

<mosaic_0001>
module attributes {stable_mosaic.version = 11 : i64} {
  func.func @cbam_kernel(%arg0: i32, %arg1: memref<4x32x256xf32, #tpu.memory_space<vmem>>, %arg2: memref<32x2xf32, #tpu.memory_space<vmem>>, %arg3: memref<1x2xf32, #tpu.memory_space<vmem>>, %arg4: memref<2x32xf32, #tpu.memory_space<vmem>>, %arg5: memref<1x32xf32, #tpu.memory_space<vmem>>, %arg6: memref<256x256xf32, #tpu.memory_space<vmem>>, %arg7: memref<256x256xf32, #tpu.memory_space<vmem>>, %arg8: memref<1x1xf32, #tpu.memory_space<vmem>>, %arg9: memref<4x32x256xf32, #tpu.memory_space<vmem>>) attributes {dimension_semantics = [#tpu.dimension_semantics<parallel>], iteration_bounds = array<i64: 2>, scalar_prefetch = 0 : i64, scratch_operands = 0 : i64, tpu.core_type = #tpu.core_type<tc>, window_params = [{transform_indices = @transform_0, window_bounds = array<i64: 4, 32, 256>}, {pipeline_mode = #tpu.pipeline_mode<synchronous>, transform_indices = @transform_1, window_bounds = array<i64: 32, 2>}, {pipeline_mode = #tpu.pipeline_mode<synchronous>, transform_indices = @transform_2, window_bounds = array<i64: 1, 2>}, {pipeline_mode = #tpu.pipeline_mode<synchronous>, transform_indices = @transform_3, window_bounds = array<i64: 2, 32>}, {pipeline_mode = #tpu.pipeline_mode<synchronous>, transform_indices = @transform_4, window_bounds = array<i64: 1, 32>}, {pipeline_mode = #tpu.pipeline_mode<synchronous>, transform_indices = @transform_5, window_bounds = array<i64: 256, 256>}, {pipeline_mode = #tpu.pipeline_mode<synchronous>, transform_indices = @transform_6, window_bounds = array<i64: 256, 256>}, {pipeline_mode = #tpu.pipeline_mode<synchronous>, transform_indices = @transform_7, window_bounds = array<i64: 1, 1>}, {transform_indices = @transform_8, window_bounds = array<i64: 4, 32, 256>}]} {
    %c0 = arith.constant 0 : index
    %c0_0 = arith.constant 0 : index
    %c0_1 = arith.constant 0 : index
    %0 = vector.load %arg1[%c0, %c0_0, %c0_1] : memref<4x32x256xf32, #tpu.memory_space<vmem>>, vector<4x32x256xf32>
    %cst = arith.constant dense<0.000000e+00> : vector<4x32xf32>
    %1 = vector.multi_reduction <add>, %0, %cst [2] : vector<4x32x256xf32> to vector<4x32xf32>
    %cst_2 = arith.constant 2.560000e+02 : f32
    %2 = vector.broadcast %cst_2 : f32 to vector<4x32xf32>
    %3 = arith.divf %1, %2 : vector<4x32xf32>
    %cst_3 = arith.constant dense<0xFF800000> : vector<4x32xf32>
    %4 = vector.multi_reduction <maximumf>, %0, %cst_3 [2] : vector<4x32x256xf32> to vector<4x32xf32>
    %5 = tpu.concatenate %3, %4 in 0 : vector<4x32xf32>, vector<4x32xf32> -> vector<8x32xf32>
    %c0_4 = arith.constant 0 : index
    %c0_5 = arith.constant 0 : index
    %6 = vector.load %arg2[%c0_4, %c0_5] : memref<32x2xf32, #tpu.memory_space<vmem>>, vector<32x2xf32>
    %cst_6 = arith.constant dense<0.000000e+00> : vector<8x2xf32>
    %7 = tpu.matmul %5, %6, %cst_6 {dimension_numbers = #tpu.dot_dimension_numbers<[1], [0], [0], [1], [0, 0, 1, 1], [], []>} : vector<8x32xf32>, vector<32x2xf32>, vector<8x2xf32> -> vector<8x2xf32>
    %c0_7 = arith.constant 0 : index
    %c0_8 = arith.constant 0 : index
    %8 = vector.load %arg3[%c0_7, %c0_8] : memref<1x2xf32, #tpu.memory_space<vmem>>, vector<1x2xf32>
    %9 = vector.broadcast %8 : vector<1x2xf32> to vector<8x2xf32>
    %10 = arith.addf %7, %9 : vector<8x2xf32>
    %cst_9 = arith.constant 0.000000e+00 : f32
    %11 = vector.broadcast %cst_9 : f32 to vector<8x2xf32>
    %12 = arith.maximumf %10, %11 : vector<8x2xf32>
    %c0_10 = arith.constant 0 : index
    %c0_11 = arith.constant 0 : index
    %13 = vector.load %arg4[%c0_10, %c0_11] : memref<2x32xf32, #tpu.memory_space<vmem>>, vector<2x32xf32>
    %cst_12 = arith.constant dense<0.000000e+00> : vector<8x32xf32>
    %14 = tpu.matmul %12, %13, %cst_12 {dimension_numbers = #tpu.dot_dimension_numbers<[1], [0], [0], [1], [0, 0, 1, 1], [], []>} : vector<8x2xf32>, vector<2x32xf32>, vector<8x32xf32> -> vector<8x32xf32>
    %c0_13 = arith.constant 0 : index
    %c0_14 = arith.constant 0 : index
    %15 = vector.load %arg5[%c0_13, %c0_14] : memref<1x32xf32, #tpu.memory_space<vmem>>, vector<1x32xf32>
    %16 = vector.broadcast %15 : vector<1x32xf32> to vector<8x32xf32>
    %17 = arith.addf %14, %16 : vector<8x32xf32>
    %18 = vector.extract_strided_slice %17 {offsets = [0, 0], sizes = [4, 32], strides = [1, 1]} : vector<8x32xf32> to vector<4x32xf32>
    %19 = vector.extract_strided_slice %17 {offsets = [4, 0], sizes = [4, 32], strides = [1, 1]} : vector<8x32xf32> to vector<4x32xf32>
    %20 = arith.addf %18, %19 : vector<4x32xf32>
    %21 = arith.negf %20 : vector<4x32xf32>
    %22 = math.exp %21 : vector<4x32xf32>
    %cst_15 = arith.constant 1.000000e+00 : f32
    %23 = vector.broadcast %cst_15 : f32 to vector<4x32xf32>
    %24 = arith.addf %23, %22 : vector<4x32xf32>
    %25 = arith.divf %23, %24 : vector<4x32xf32>
    %26 = vector.shape_cast %25 : vector<4x32xf32> to vector<4x32x1xf32>
    %27 = vector.broadcast %26 : vector<4x32x1xf32> to vector<4x32x256xf32>
    %28 = arith.mulf %0, %27 : vector<4x32x256xf32>
    %cst_16 = arith.constant dense<0.000000e+00> : vector<4x256xf32>
    %29 = vector.multi_reduction <add>, %28, %cst_16 [1] : vector<4x32x256xf32> to vector<4x256xf32>
    %cst_17 = arith.constant 3.200000e+01 : f32
    %30 = vector.broadcast %cst_17 : f32 to vector<4x256xf32>
    %31 = arith.divf %29, %30 : vector<4x256xf32>
    %cst_18 = arith.constant dense<0xFF800000> : vector<4x256xf32>
    %32 = vector.multi_reduction <maximumf>, %28, %cst_18 [1] : vector<4x32x256xf32> to vector<4x256xf32>
    %c0_19 = arith.constant 0 : index
    %c0_20 = arith.constant 0 : index
    %c0_21 = arith.constant 0 : index
    %33 = vector.load %arg9[%c0_19, %c0_20, %c0_21] : memref<4x32x256xf32, #tpu.memory_space<vmem>>, vector<4x32x256xf32>
    tpu.vector_store %arg9[%c0_19, %c0_20, %c0_21], %28 {strides = array<i32>} : memref<4x32x256xf32, #tpu.memory_space<vmem>>, vector<4x32x256xf32>,
    %c0_22 = arith.constant 0 : index
    %c0_23 = arith.constant 0 : index
    %34 = vector.load %arg6[%c0_22, %c0_23] : memref<256x256xf32, #tpu.memory_space<vmem>>, vector<256x256xf32>
    %cst_24 = arith.constant dense<0.000000e+00> : vector<4x256xf32>
    %35 = tpu.matmul %31, %34, %cst_24 {dimension_numbers = #tpu.dot_dimension_numbers<[1], [0], [0], [1], [0, 0, 1, 1], [], []>} : vector<4x256xf32>, vector<256x256xf32>, vector<4x256xf32> -> vector<4x256xf32>
    %c0_25 = arith.constant 0 : index
    %c0_26 = arith.constant 0 : index
    %36 = vector.load %arg7[%c0_25, %c0_26] : memref<256x256xf32, #tpu.memory_space<vmem>>, vector<256x256xf32>
    %cst_27 = arith.constant dense<0.000000e+00> : vector<4x256xf32>
    %37 = tpu.matmul %32, %36, %cst_27 {dimension_numbers = #tpu.dot_dimension_numbers<[1], [0], [0], [1], [0, 0, 1, 1], [], []>} : vector<4x256xf32>, vector<256x256xf32>, vector<4x256xf32> -> vector<4x256xf32>
    %38 = arith.addf %35, %37 : vector<4x256xf32>
    %c0_28 = arith.constant 0 : index
    %c0_29 = arith.constant 0 : index
    %39 = vector.load %arg8[%c0_28, %c0_29] : memref<1x1xf32, #tpu.memory_space<vmem>>, vector<1x1xf32>
    %40 = vector.broadcast %39 : vector<1x1xf32> to vector<4x256xf32>
    %41 = arith.addf %38, %40 : vector<4x256xf32>
    %42 = arith.negf %41 : vector<4x256xf32>
    %43 = math.exp %42 : vector<4x256xf32>
    %cst_30 = arith.constant 1.000000e+00 : f32
    %44 = vector.broadcast %cst_30 : f32 to vector<4x256xf32>
    %45 = arith.addf %44, %43 : vector<4x256xf32>
    %46 = arith.divf %44, %45 : vector<4x256xf32>
    %c0_31 = arith.constant 0 : index
    %c0_32 = arith.constant 0 : index
    %c0_33 = arith.constant 0 : index
    %47 = vector.load %arg9[%c0_31, %c0_32, %c0_33] : memref<4x32x256xf32, #tpu.memory_space<vmem>>, vector<4x32x256xf32>
    %48 = vector.shape_cast %46 : vector<4x256xf32> to vector<4x1x256xf32>
    %49 = vector.broadcast %48 : vector<4x1x256xf32> to vector<4x32x256xf32>
    %50 = arith.mulf %47, %49 : vector<4x32x256xf32>
    %c0_34 = arith.constant 0 : index
    %c0_35 = arith.constant 0 : index
    %c0_36 = arith.constant 0 : index
    %51 = vector.load %arg9[%c0_34, %c0_35, %c0_36] : memref<4x32x256xf32, #tpu.memory_space<vmem>>, vector<4x32x256xf32>
    tpu.vector_store %arg9[%c0_34, %c0_35, %c0_36], %50 {strides = array<i32>} : memref<4x32x256xf32, #tpu.memory_space<vmem>>, vector<4x32x256xf32>,
    return
  }
  func.func @transform_0(%arg0: i32) -> (i32, i32, i32) {
    %c0_i32 = arith.constant 0 : i32
    %c0_i32_0 = arith.constant 0 : i32
    %c0_i32_1 = arith.constant 0 : i32
    return %arg0, %c0_i32, %c0_i32_0 : i32, i32, i32
  }
  func.func @transform_1(%arg0: i32) -> (i32, i32) {
    %c0_i32 = arith.constant 0 : i32
    %c0_i32_0 = arith.constant 0 : i32
    %c0_i32_1 = arith.constant 0 : i32
    return %c0_i32, %c0_i32_0 : i32, i32
  }
  func.func @transform_2(%arg0: i32) -> (i32, i32) {
    %c0_i32 = arith.constant 0 : i32
    %c0_i32_0 = arith.constant 0 : i32
    %c0_i32_1 = arith.constant 0 : i32
    return %c0_i32, %c0_i32_0 : i32, i32
  }
  func.func @transform_3(%arg0: i32) -> (i32, i32) {
    %c0_i32 = arith.constant 0 : i32
    %c0_i32_0 = arith.constant 0 : i32
    %c0_i32_1 = arith.constant 0 : i32
    return %c0_i32, %c0_i32_0 : i32, i32
  }
  func.func @transform_4(%arg0: i32) -> (i32, i32) {
    %c0_i32 = arith.constant 0 : i32
    %c0_i32_0 = arith.constant 0 : i32
    %c0_i32_1 = arith.constant 0 : i32
    return %c0_i32, %c0_i32_0 : i32, i32
  }
  func.func @transform_5(%arg0: i32) -> (i32, i32) {
    %c0_i32 = arith.constant 0 : i32
    %c0_i32_0 = arith.constant 0 : i32
    %c0_i32_1 = arith.constant 0 : i32
    return %c0_i32, %c0_i32_0 : i32, i32
  }
  func.func @transform_6(%arg0: i32) -> (i32, i32) {
    %c0_i32 = arith.constant 0 : i32
    %c0_i32_0 = arith.constant 0 : i32
    %c0_i32_1 = arith.constant 0 : i32
    return %c0_i32, %c0_i32_0 : i32, i32
  }
  func.func @transform_7(%arg0: i32) -> (i32, i32) {
    %c0_i32 = arith.constant 0 : i32
    %c0_i32_0 = arith.constant 0 : i32
    %c0_i32_1 = arith.constant 0 : i32
    return %c0_i32, %c0_i32_0 : i32, i32
  }
  func.func @transform_8(%arg0: i32) -> (i32, i32, i32) {
    %c0_i32 = arith.constant 0 : i32
    %c0_i32_0 = arith.constant 0 : i32
    %c0_i32_1 = arith.constant 0 : i32
    return %arg0, %c0_i32, %c0_i32_0 : i32, i32, i32
  }
}

</mosaic_0001>

<llo_original>
// kernel: cbam.1
$region0: #{cbam.1}
  #allocation0 [shape = 'u32[]', space=smem, size = 0x4, offset = 0x4, fixed_abs, tag = 'smem constant byte address 0x4 - core index']
  #allocation1 [shape = 'u32[144,128]{1,0:T(1,128)}', space=vmem, size = 0x12000, scoped, tag = 'internal scratch']
  #allocation2 [shape = 'f32[1,1]{1,0:T(1,128)S(1)}', space=vmem, size = 0x200, scoped, tag = 'scoped memory for cbam.1']
  %s0 = inlined_call_operand.vmem [shape: f32[8,32,256], index: 0, kind: input, shape index: {}]
  %s1 = inlined_call_operand.vmem [shape: f32[32,2], index: 1, kind: input, shape index: {}]
  %s2 = inlined_call_operand.vmem [shape: f32[1,2], index: 2, kind: input, shape index: {}]
  %s3 = inlined_call_operand.vmem [shape: f32[2,32], index: 3, kind: input, shape index: {}]
  %s4 = inlined_call_operand.vmem [shape: f32[1,32], index: 4, kind: input, shape index: {}]
  %s5 = inlined_call_operand.vmem [shape: f32[256,256], index: 5, kind: input, shape index: {}]
  %s6 = inlined_call_operand.vmem [shape: f32[256,256], index: 6, kind: input, shape index: {}]
  %s7 = inlined_call_operand.<no memory space> [shape: f32[1,1], index: 7, kind: input, shape index: {}]
  %s8 = inlined_call_operand.vmem [shape: f32[8,32,256], index: 8, kind: output, shape index: {}]
  %s9 = sld [smem:[#allocation0]]
  $region65: #{cbam.1} parent=0
    _
  %s11 = ssub.s32 1, %s9
  %s12 = scalar_select 0, %s11, %s9
  %v13 = vstv %s7
  %14 = vst [vmem:[#allocation2] sm:$0x1] %v13
  loop: start=0, step=1, limit=4
  $region2: #{cbam.1} parent=0 // loop_pre_header
    _
  $region3: #{cbam.1} parent=0 // loop_header
    %s16 = sphi 0, %s20
    %p17 = scmp.ge.s32.totalorder %s16, 4
    %s26 = sphi 0, %s28
    %s29 = sphi 0, %s26
    %s30 = sphi 0, %s29
    %s46 = sphi 0, %s30
    %s50 = sphi 0, %s50
    %s52 = sphi 0, %s50
    %s53 = sphi 0, %s52
    %s67 = sphi 0, %s53
    %s71 = sphi 0, %s71
    %s73 = sphi 0, %s71
    %s74 = sphi 0, %s73
    %s88 = sphi 0, %s74
    %s92 = sphi 0, %s92
    %s94 = sphi 0, %s92
    %s95 = sphi 0, %s94
    %s109 = sphi 0, %s95
    %s113 = sphi 0, %s113
    %s115 = sphi 0, %s113
    %s116 = sphi 0, %s115
    %s130 = sphi 0, %s116
    %s134 = sphi 0, %s134
    %s136 = sphi 0, %s134
    %s137 = sphi 0, %s136
    %s151 = sphi 0, %s137
    %s155 = sphi 0, %s155
    %s157 = sphi 0, %s155
    %s158 = sphi 0, %s157
    %s172 = sphi 0, %s158
    %s176 = sphi 0, %s176
    %s178 = sphi 0, %s176
    %s179 = sphi 0, %s178
    %s193 = sphi 0, %s179
    %s199 = sphi 0, %s201
    %s202 = sphi 0, %s199
    %s203 = sphi 0, %s202
    %s219 = sphi 0, %s203
  $region4: #{cbam.1} parent=0 // loop_header_branch
    %19 = sbr.rel (%p17) target = $region8
  $region5: #{cbam.1} parent=0 // loop_body
    %s21 = ssub.s32 %s16, 1
    %s22 = ssub.s32 %s16, 2
    %s23 = sadd.s32 %s16, 1
    %s24 = ssub.s32 %s16, %s23
    %p25 = scmp.eq.s32.totalorder %s24, 0
    %s27 = sadd.s32 %s26, 1
    %s28 = scalar_select %p25, %s26, %s27
    %p31 = pneg %p25
    %p32 = scmp.eq.s32.totalorder %s16, 1
    %p33 = por %p31, %p32
    %p34 = scmp.ne.s32.totalorder %s26, %s29
    %p35 = scmp.eq.s32.totalorder %s16, 0
    %p36 = por %p34, %p35
    %p37 = scmp.ne.s32.totalorder %s26, %s29
    %p38 = scmp.eq.s32.totalorder %s21, 1
    %p39 = por %p37, %p38
    %p40 = scmp.ne.s32.totalorder %s29, %s30
    %p41 = scmp.eq.s32.totalorder %s21, 0
    %p42 = por %p40, %p41
    %p43 = scmp.ne.s32.totalorder %s29, %s30
    %p44 = scmp.eq.s32.totalorder %s22, 1
    %p45 = por %p43, %p44
    %p47 = scmp.ne.s32.totalorder %s30, %s46
    %p48 = scmp.eq.s32.totalorder %s22, 0
    %p49 = por %p47, %p48
    %s51 = sadd.s32 %s50, 1
    %p54 = scmp.eq.s32.totalorder %s16, 1
    %p55 = scmp.ne.s32.totalorder %s50, %s52
    %p56 = scmp.eq.s32.totalorder %s16, 0
    %p57 = por %p55, %p56
    %p58 = scmp.ne.s32.totalorder %s50, %s52
    %p59 = scmp.eq.s32.totalorder %s21, 1
    %p60 = por %p58, %p59
    %p61 = scmp.ne.s32.totalorder %s52, %s53
    %p62 = scmp.eq.s32.totalorder %s21, 0
    %p63 = por %p61, %p62
    %p64 = scmp.ne.s32.totalorder %s52, %s53
    %p65 = scmp.eq.s32.totalorder %s22, 1
    %p66 = por %p64, %p65
    %p68 = scmp.ne.s32.totalorder %s53, %s67
    %p69 = scmp.eq.s32.totalorder %s22, 0
    %p70 = por %p68, %p69
    %s72 = sadd.s32 %s71, 1
    %p75 = scmp.eq.s32.totalorder %s16, 1
    %p76 = scmp.ne.s32.totalorder %s71, %s73
    %p77 = scmp.eq.s32.totalorder %s16, 0
    %p78 = por %p76, %p77
    %p79 = scmp.ne.s32.totalorder %s71, %s73
    %p80 = scmp.eq.s32.totalorder %s21, 1
    %p81 = por %p79, %p80
    %p82 = scmp.ne.s32.totalorder %s73, %s74
    %p83 = scmp.eq.s32.totalorder %s21, 0
    %p84 = por %p82, %p83
    %p85 = scmp.ne.s32.totalorder %s73, %s74
    %p86 = scmp.eq.s32.totalorder %s22, 1
    %p87 = por %p85, %p86
    %p89 = scmp.ne.s32.totalorder %s74, %s88
    %p90 = scmp.eq.s32.totalorder %s22, 0
    %p91 = por %p89, %p90
    %s93 = sadd.s32 %s92, 1
    %p96 = scmp.eq.s32.totalorder %s16, 1
    %p97 = scmp.ne.s32.totalorder %s92, %s94
    %p98 = scmp.eq.s32.totalorder %s16, 0
    %p99 = por %p97, %p98
    %p100 = scmp.ne.s32.totalorder %s92, %s94
    %p101 = scmp.eq.s32.totalorder %s21, 1
    %p102 = por %p100, %p101
    %p103 = scmp.ne.s32.totalorder %s94, %s95
    %p104 = scmp.eq.s32.totalorder %s21, 0
    %p105 = por %p103, %p104
    %p106 = scmp.ne.s32.totalorder %s94, %s95
    %p107 = scmp.eq.s32.totalorder %s22, 1
    %p108 = por %p106, %p107
    %p110 = scmp.ne.s32.totalorder %s95, %s109
    %p111 = scmp.eq.s32.totalorder %s22, 0
    %p112 = por %p110, %p111
    %s114 = sadd.s32 %s113, 1
    %p117 = scmp.eq.s32.totalorder %s16, 1
    %p118 = scmp.ne.s32.totalorder %s113, %s115
    %p119 = scmp.eq.s32.totalorder %s16, 0
    %p120 = por %p118, %p119
    %p121 = scmp.ne.s32.totalorder %s113, %s115
    %p122 = scmp.eq.s32.totalorder %s21, 1
    %p123 = por %p121, %p122
    %p124 = scmp.ne.s32.totalorder %s115, %s116
    %p125 = scmp.eq.s32.totalorder %s21, 0
    %p126 = por %p124, %p125
    %p127 = scmp.ne.s32.totalorder %s115, %s116
    %p128 = scmp.eq.s32.totalorder %s22, 1
    %p129 = por %p127, %p128
    %p131 = scmp.ne.s32.totalorder %s116, %s130
    %p132 = scmp.eq.s32.totalorder %s22, 0
    %p133 = por %p131, %p132
    %s135 = sadd.s32 %s134, 1
    %p138 = scmp.eq.s32.totalorder %s16, 1
    %p139 = scmp.ne.s32.totalorder %s134, %s136
    %p140 = scmp.eq.s32.totalorder %s16, 0
    %p141 = por %p139, %p140
    %p142 = scmp.ne.s32.totalorder %s134, %s136
    %p143 = scmp.eq.s32.totalorder %s21, 1
    %p144 = por %p142, %p143
    %p145 = scmp.ne.s32.totalorder %s136, %s137
    %p146 = scmp.eq.s32.totalorder %s21, 0
    %p147 = por %p145, %p146
    %p148 = scmp.ne.s32.totalorder %s136, %s137
    %p149 = scmp.eq.s32.totalorder %s22, 1
    %p150 = por %p148, %p149
    %p152 = scmp.ne.s32.totalorder %s137, %s151
    %p153 = scmp.eq.s32.totalorder %s22, 0
    %p154 = por %p152, %p153
    %s156 = sadd.s32 %s155, 1
    %p159 = scmp.eq.s32.totalorder %s16, 1
    %p160 = scmp.ne.s32.totalorder %s155, %s157
    %p161 = scmp.eq.s32.totalorder %s16, 0
    %p162 = por %p160, %p161
    %p163 = scmp.ne.s32.totalorder %s155, %s157
    %p164 = scmp.eq.s32.totalorder %s21, 1
    %p165 = por %p163, %p164
    %p166 = scmp.ne.s32.totalorder %s157, %s158
    %p167 = scmp.eq.s32.totalorder %s21, 0
    %p168 = por %p166, %p167
    %p169 = scmp.ne.s32.totalorder %s157, %s158
    %p170 = scmp.eq.s32.totalorder %s22, 1
    %p171 = por %p169, %p170
    %p173 = scmp.ne.s32.totalorder %s158, %s172
    %p174 = scmp.eq.s32.totalorder %s22, 0
    %p175 = por %p173, %p174
    %s177 = sadd.s32 %s176, 1
    %p180 = scmp.eq.s32.totalorder %s16, 1
    %p181 = scmp.ne.s32.totalorder %s176, %s178
    %p182 = scmp.eq.s32.totalorder %s16, 0
    %p183 = por %p181, %p182
    %p184 = scmp.ne.s32.totalorder %s176, %s178
    %p185 = scmp.eq.s32.totalorder %s21, 1
    %p186 = por %p184, %p185
    %p187 = scmp.ne.s32.totalorder %s178, %s179
    %p188 = scmp.eq.s32.totalorder %s21, 0
    %p189 = por %p187, %p188
    %p190 = scmp.ne.s32.totalorder %s178, %s179
    %p191 = scmp.eq.s32.totalorder %s22, 1
    %p192 = por %p190, %p191
    %p194 = scmp.ne.s32.totalorder %s179, %s193
    %p195 = scmp.eq.s32.totalorder %s22, 0
    %p196 = por %p194, %p195
    %s197 = ssub.s32 %s16, %s23
    %p198 = scmp.eq.s32.totalorder %s197, 0
    %s200 = sadd.s32 %s199, 1
    %s201 = scalar_select %p198, %s199, %s200
    %p204 = pneg %p198
    %p205 = scmp.eq.s32.totalorder %s16, 1
    %p206 = por %p204, %p205
    %p207 = scmp.ne.s32.totalorder %s199, %s202
    %p208 = scmp.eq.s32.totalorder %s16, 0
    %p209 = por %p207, %p208
    %p210 = scmp.ne.s32.totalorder %s199, %s202
    %p211 = scmp.eq.s32.totalorder %s21, 1
    %p212 = por %p210, %p211
    %p213 = scmp.ne.s32.totalorder %s202, %s203
    %p214 = scmp.eq.s32.totalorder %s21, 0
    %p215 = por %p213, %p214
    %p216 = scmp.ne.s32.totalorder %s202, %s203
    %p217 = scmp.eq.s32.totalorder %s22, 1
    %p218 = por %p216, %p217
    %p220 = scmp.ne.s32.totalorder %s203, %s219
    %p221 = scmp.eq.s32.totalorder %s22, 0
    %p222 = por %p220, %p221
    %p223 = scmp.le.s32.totalorder 1, %s16
    %p224 = scmp.lt.s32.totalorder %s16, 3
    %p225 = pnand %p223, %p224
    %p226 = pneg %p225
    // Predicated region
    $region9: #{cbam.1} parent=5 // pred_check
      _
    $region10: #{cbam.1} parent=5 // pred_check_branch
      %228 = sbr.rel (%p225) target = $region12
    $region11: #{cbam.1} parent=5 // pred_region
      %s229 = ssub.s32 %s16, 1
      // Predicated region
      $region13: #{cbam.1} parent=11 // pred_check
        %p230 = pneg %p63
      $region14: #{cbam.1} parent=11 // pred_check_branch
        %232 = sbr.rel (%p230) target = $region16
      $region15: #{cbam.1} parent=11 // pred_region
        _
      $region16: #{cbam.1} parent=11 // pred_fallthru
        _
      // Predicated region
      $region17: #{cbam.1} parent=11 // pred_check
        %p233 = pneg %p84
      $region18: #{cbam.1} parent=11 // pred_check_branch
        %235 = sbr.rel (%p233) target = $region20
      $region19: #{cbam.1} parent=11 // pred_region
        _
      $region20: #{cbam.1} parent=11 // pred_fallthru
        _
      // Predicated region
      $region21: #{cbam.1} parent=11 // pred_check
        %p236 = pneg %p105
      $region22: #{cbam.1} parent=11 // pred_check_branch
        %238 = sbr.rel (%p236) target = $region24
      $region23: #{cbam.1} parent=11 // pred_region
        _
      $region24: #{cbam.1} parent=11 // pred_fallthru
        _
      // Predicated region
      $region25: #{cbam.1} parent=11 // pred_check
        %p239 = pneg %p126
      $region26: #{cbam.1} parent=11 // pred_check_branch
        %241 = sbr.rel (%p239) target = $region28
      $region27: #{cbam.1} parent=11 // pred_region
        _
      $region28: #{cbam.1} parent=11 // pred_fallthru
        _
      // Predicated region
      $region29: #{cbam.1} parent=11 // pred_check
        %p242 = pneg %p147
      $region30: #{cbam.1} parent=11 // pred_check_branch
        %244 = sbr.rel (%p242) target = $region32
      $region31: #{cbam.1} parent=11 // pred_region
        _
      $region32: #{cbam.1} parent=11 // pred_fallthru
        _
      // Predicated region
      $region33: #{cbam.1} parent=11 // pred_check
        %p245 = pneg %p168
      $region34: #{cbam.1} parent=11 // pred_check_branch
        %247 = sbr.rel (%p245) target = $region36
      $region35: #{cbam.1} parent=11 // pred_region
        _
      $region36: #{cbam.1} parent=11 // pred_fallthru
        _
      // Predicated region
      $region37: #{cbam.1} parent=11 // pred_check
        %p248 = pneg %p189
      $region38: #{cbam.1} parent=11 // pred_check_branch
        %250 = sbr.rel (%p248) target = $region40
      $region39: #{cbam.1} parent=11 // pred_region
        _
      $region40: #{cbam.1} parent=11 // pred_fallthru
        _
    $region12: #{cbam.1} parent=5 // pred_fallthru
      _
    %p251 = scmp.lt.s32.totalorder %s16, 2
    // Predicated region
    $region41: #{cbam.1} parent=5 // pred_check
      %p252 = pneg %p251
    $region42: #{cbam.1} parent=5 // pred_check_branch
      %254 = sbr.rel (%p252) target = $region44
    $region43: #{cbam.1} parent=5 // pred_region
      // Predicated region
      $region45: #{cbam.1} parent=43 // pred_check
        %p255 = pneg %p36
      $region46: #{cbam.1} parent=43 // pred_check_branch
        %257 = sbr.rel (%p255) target = $region48
      $region47: #{cbam.1} parent=43 // pred_region
        %s258 = smul.u32 4, %s16
        %p259 = scmp.lt.s32.totalorder %s258, 7
        %s260 = scalar_select %p259, %s258, 7
        %s261 = smul.addr %s260, 8
        %s262 = smul.addr %s261, 8
        %s263 = scalar_lea.vmem %s0, %s262
        %s264 = smul.u32 4, %s16
      $region48: #{cbam.1} parent=43 // pred_fallthru
        _
    $region44: #{cbam.1} parent=5 // pred_fallthru
      _
    %p265 = scmp.le.s32.totalorder 1, %s16
    %p266 = scmp.lt.s32.totalorder %s16, 3
    %p267 = pnand %p265, %p266
    %p268 = pneg %p267
    // Predicated region
    $region49: #{cbam.1} parent=5 // pred_check
      _
    $region50: #{cbam.1} parent=5 // pred_check_branch
      %270 = sbr.rel (%p267) target = $region52
    $region51: #{cbam.1} parent=5 // pred_region
      %s271 = ssub.s32 %s16, 1
      %s272 = smul.u32 4, %s21
      %p273 = scmp.lt.s32.totalorder %s272, 7
      %s274 = scalar_select %p273, %s272, 7
      %s275 = smul.addr %s274, 8
      %s276 = smul.addr %s275, 8
      %s277 = scalar_lea.vmem %s0, %s276
      %p278 = pneg %p42
      %p279 = pneg %p39
      %p280 = pneg %p63
      %p281 = pneg %p60
      %p282 = pneg %p84
      %p283 = pneg %p81
      %p284 = pneg %p105
      %p285 = pneg %p102
      %p286 = pneg %p126
      %p287 = pneg %p123
      %p288 = pneg %p147
      %p289 = pneg %p144
      %p290 = pneg %p168
      %p291 = pneg %p165
      %p292 = pneg %p189
      %p293 = pneg %p186
      %p294 = pneg %p215
      %p295 = pneg %p212
      %s296 = smul.u32 4, %s21
      %p297 = scmp.lt.s32.totalorder %s296, 7
      %s298 = scalar_select %p297, %s296, 7
      %s299 = smul.addr %s298, 8
      %s300 = smul.addr %s299, 8
      %s301 = scalar_lea.vmem %s8, %s300
      %s302 = smul.u32 4, %s21
      %p303 = scmp.lt.s32.totalorder %s302, 7
      %s304 = scalar_select %p303, %s302, 7
      %s305 = smul.addr %s304, 8
      %s306 = smul.addr %s305, 8
      %s307 = scalar_lea.vmem %s0, %s306
      %s308 = smul.u32 4, %s21
      %s309 = smul.u32 4, %s21
      %p310 = scmp.lt.s32.totalorder %s309, 7
      %s311 = scalar_select %p310, %s309, 7
      %s312 = smul.addr %s311, 8
      %s313 = smul.addr %s312, 8
      %s314 = scalar_lea.vmem %s8, %s313
      %s315 = smul.u32 4, %s21
      %v316 = vld [vmem:[%s307] sm:$0xff]
      %v317 = vld [vmem:[%s307 + $0x8] sm:$0xff]
      %v318 = vld [vmem:[%s307 + $0x10] sm:$0xff]
      %v319 = vld [vmem:[%s307 + $0x18] sm:$0xff]
      %v320 = vld [vmem:[%s307 + $0x20] sm:$0xff]
      %v321 = vld [vmem:[%s307 + $0x28] sm:$0xff]
      %v322 = vld [vmem:[%s307 + $0x30] sm:$0xff]
      %v323 = vld [vmem:[%s307 + $0x38] sm:$0xff]
      %v324 = vld [vmem:[%s307 + $0x40] sm:$0xff]
      %v325 = vld [vmem:[%s307 + $0x48] sm:$0xff]
      %v326 = vld [vmem:[%s307 + $0x50] sm:$0xff]
      %v327 = vld [vmem:[%s307 + $0x58] sm:$0xff]
      %v328 = vld [vmem:[%s307 + $0x60] sm:$0xff]
      %v329 = vld [vmem:[%s307 + $0x68] sm:$0xff]
      %v330 = vld [vmem:[%s307 + $0x70] sm:$0xff]
      %v331 = vld [vmem:[%s307 + $0x78] sm:$0xff]
      %v332 = vld [vmem:[%s307 + $0x80] sm:$0xff]
      %v333 = vld [vmem:[%s307 + $0x88] sm:$0xff]
      %v334 = vld [vmem:[%s307 + $0x90] sm:$0xff]
      %v335 = vld [vmem:[%s307 + $0x98] sm:$0xff]
      %v336 = vld [vmem:[%s307 + $0xa0] sm:$0xff]
      %v337 = vld [vmem:[%s307 + $0xa8] sm:$0xff]
      %v338 = vld [vmem:[%s307 + $0xb0] sm:$0xff]
      %v339 = vld [vmem:[%s307 + $0xb8] sm:$0xff]
      %v340 = vld [vmem:[%s307 + $0xc0] sm:$0xff]
      %v341 = vld [vmem:[%s307 + $0xc8] sm:$0xff]
      %v342 = vld [vmem:[%s307 + $0xd0] sm:$0xff]
      %v343 = vld [vmem:[%s307 + $0xd8] sm:$0xff]
      %v344 = vld [vmem:[%s307 + $0xe0] sm:$0xff]
      %v345 = vld [vmem:[%s307 + $0xe8] sm:$0xff]
      %v346 = vld [vmem:[%s307 + $0xf0] sm:$0xff]
      %v347 = vld [vmem:[%s307 + $0xf8] sm:$0xff]
      %v348 = vadd.f32 %v316, %v317
      %349 = vadd.xlane.f32.xlu0 %v348
      %v350 = vpop.xlane.xlu0 %349
      %v351 = vadd.f32 %v318, %v319
      %352 = vadd.xlane.f32.xlu0 %v351
      %v353 = vpop.xlane.xlu0 %352
      %v354 = vadd.f32 %v320, %v321
      %355 = vadd.xlane.f32.xlu0 %v354
      %v356 = vpop.xlane.xlu0 %355
      %v357 = vadd.f32 %v322, %v323
      %358 = vadd.xlane.f32.xlu0 %v357
      %v359 = vpop.xlane.xlu0 %358
      %v360 = vadd.f32 %v324, %v325
      %361 = vadd.xlane.f32.xlu0 %v360
      %v362 = vpop.xlane.xlu0 %361
      %v363 = vadd.f32 %v326, %v327
      %364 = vadd.xlane.f32.xlu0 %v363
      %v365 = vpop.xlane.xlu0 %364
      %v366 = vadd.f32 %v328, %v329
      %367 = vadd.xlane.f32.xlu0 %v366
      %v368 = vpop.xlane.xlu0 %367
      %v369 = vadd.f32 %v330, %v331
      %370 = vadd.xlane.f32.xlu0 %v369
      %v371 = vpop.xlane.xlu0 %370
      %v372 = vadd.f32 %v332, %v333
      %373 = vadd.xlane.f32.xlu0 %v372
      %v374 = vpop.xlane.xlu0 %373
      %v375 = vadd.f32 %v334, %v335
      %376 = vadd.xlane.f32.xlu0 %v375
      %v377 = vpop.xlane.xlu0 %376
      %v378 = vadd.f32 %v336, %v337
      %379 = vadd.xlane.f32.xlu0 %v378
      %v380 = vpop.xlane.xlu0 %379
      %v381 = vadd.f32 %v338, %v339
      %382 = vadd.xlane.f32.xlu0 %v381
      %v383 = vpop.xlane.xlu0 %382
      %v384 = vadd.f32 %v340, %v341
      %385 = vadd.xlane.f32.xlu0 %v384
      %v386 = vpop.xlane.xlu0 %385
      %v387 = vadd.f32 %v342, %v343
      %388 = vadd.xlane.f32.xlu0 %v387
      %v389 = vpop.xlane.xlu0 %388
      %v390 = vadd.f32 %v344, %v345
      %391 = vadd.xlane.f32.xlu0 %v390
      %v392 = vpop.xlane.xlu0 %391
      %v393 = vadd.f32 %v346, %v347
      %394 = vadd.xlane.f32.xlu0 %v393
      %v395 = vpop.xlane.xlu0 %394
      %v396 = vrcp.pop 256.0
      %v397 = vmul.f32 %v350, %v396
      %v398 = vmul.f32 %v353, %v396
      %v399 = vmul.f32 %v356, %v396
      %v400 = vmul.f32 %v359, %v396
      %v401 = vmul.f32 %v362, %v396
      %v402 = vmul.f32 %v365, %v396
      %v403 = vmul.f32 %v368, %v396
      %v404 = vmul.f32 %v371, %v396
      %v405 = vmul.f32 %v374, %v396
      %v406 = vmul.f32 %v377, %v396
      %v407 = vmul.f32 %v380, %v396
      %v408 = vmul.f32 %v383, %v396
      %v409 = vmul.f32 %v386, %v396
      %v410 = vmul.f32 %v389, %v396
      %v411 = vmul.f32 %v392, %v396
      %v412 = vmul.f32 %v395, %v396
      %v413 = vmax.f32 %v316, %v317
      %414 = vmax.xlane.f32.xlu0 %v413
      %v415 = vpop.xlane.xlu0 %414
      %v416 = vmax.f32 %v318, %v319
      %417 = vmax.xlane.f32.xlu0 %v416
      %v418 = vpop.xlane.xlu0 %417
      %v419 = vmax.f32 %v320, %v321
      %420 = vmax.xlane.f32.xlu0 %v419
      %v421 = vpop.xlane.xlu0 %420
      %v422 = vmax.f32 %v322, %v323
      %423 = vmax.xlane.f32.xlu0 %v422
      %v424 = vpop.xlane.xlu0 %423
      %v425 = vmax.f32 %v324, %v325
      %426 = vmax.xlane.f32.xlu0 %v425
      %v427 = vpop.xlane.xlu0 %426
      %v428 = vmax.f32 %v326, %v327
      %429 = vmax.xlane.f32.xlu0 %v428
      %v430 = vpop.xlane.xlu0 %429
      %v431 = vmax.f32 %v328, %v329
      %432 = vmax.xlane.f32.xlu0 %v431
      %v433 = vpop.xlane.xlu0 %432
      %v434 = vmax.f32 %v330, %v331
      %435 = vmax.xlane.f32.xlu0 %v434
      %v436 = vpop.xlane.xlu0 %435
      %v437 = vmax.f32 %v332, %v333
      %438 = vmax.xlane.f32.xlu0 %v437
      %v439 = vpop.xlane.xlu0 %438
      %v440 = vmax.f32 %v334, %v335
      %441 = vmax.xlane.f32.xlu0 %v440
      %v442 = vpop.xlane.xlu0 %441
      %v443 = vmax.f32 %v336, %v337
      %444 = vmax.xlane.f32.xlu0 %v443
      %v445 = vpop.xlane.xlu0 %444
      %v446 = vmax.f32 %v338, %v339
      %447 = vmax.xlane.f32.xlu0 %v446
      %v448 = vpop.xlane.xlu0 %447
      %v449 = vmax.f32 %v340, %v341
      %450 = vmax.xlane.f32.xlu0 %v449
      %v451 = vpop.xlane.xlu0 %450
      %v452 = vmax.f32 %v342, %v343
      %453 = vmax.xlane.f32.xlu0 %v452
      %v454 = vpop.xlane.xlu0 %453
      %v455 = vmax.f32 %v344, %v345
      %456 = vmax.xlane.f32.xlu0 %v455
      %v457 = vpop.xlane.xlu0 %456
      %v458 = vmax.f32 %v346, %v347
      %459 = vmax.xlane.f32.xlu0 %v458
      %v460 = vpop.xlane.xlu0 %459
      %v477 = vlaneseq
      %v478 = vand.u32 %v477, 127
      %v479 = vlaneseq
      %v480 = vshrl.u32 %v479, 7
      %v481 = vsub.s32 %v478, %v480
      %v482 = vrot.slane %v397, %v481
      %v483 = vadd.s32 %v478, 4294967288
      %v484 = vlaneseq
      %v485 = vshrl.u32 %v484, 7
      %v486 = vsub.s32 %v483, %v485
      %v487 = vrot.slane %v398, %v486
      %vm488 = vcmask 130112
      %v489 = vsel %vm488, %v487, %v482
      %v490 = vadd.s32 %v478, 4294967280
      %v491 = vlaneseq
      %v492 = vshrl.u32 %v491, 7
      %v493 = vsub.s32 %v490, %v492
      %v494 = vrot.slane %v399, %v493
      %vm495 = vcmask 195712
      %v496 = vsel %vm495, %v494, %v489
      %v497 = vadd.s32 %v478, 4294967272
      %v498 = vlaneseq
      %v499 = vshrl.u32 %v498, 7
      %v500 = vsub.s32 %v497, %v499
      %v501 = vrot.slane %v400, %v500
      %vm502 = vcmask 261312
      %v503 = vsel %vm502, %v501, %v496
      %v504 = vlaneseq
      %v505 = vshrl.u32 %v504, 7
      %v506 = vsub.s32 %v478, %v505
      %v507 = vrot.slane %v401, %v506
      %v508 = vlaneseq
      %v509 = vshrl.u32 %v508, 7
      %v510 = vsub.s32 %v483, %v509
      %v511 = vrot.slane %v402, %v510
      %v512 = vsel %vm488, %v511, %v507
      %v513 = vlaneseq
      %v514 = vshrl.u32 %v513, 7
      %v515 = vsub.s32 %v490, %v514
      %v516 = vrot.slane %v403, %v515
      %v517 = vsel %vm495, %v516, %v512
      %v518 = vlaneseq
      %v519 = vshrl.u32 %v518, 7
      %v520 = vsub.s32 %v497, %v519
      %v521 = vrot.slane %v404, %v520
      %v522 = vsel %vm502, %v521, %v517
      %v523 = vlaneseq
      %v524 = vshrl.u32 %v523, 7
      %v525 = vsub.s32 %v478, %v524
      %v526 = vrot.slane %v405, %v525
      %v527 = vlaneseq
      %v528 = vshrl.u32 %v527, 7
      %v529 = vsub.s32 %v483, %v528
      %v530 = vrot.slane %v406, %v529
      %v531 = vsel %vm488, %v530, %v526
      %v532 = vlaneseq
      %v533 = vshrl.u32 %v532, 7
      %v534 = vsub.s32 %v490, %v533
      %v535 = vrot.slane %v407, %v534
      %v536 = vsel %vm495, %v535, %v531
      %v537 = vlaneseq
      %v538 = vshrl.u32 %v537, 7
      %v539 = vsub.s32 %v497, %v538
      %v540 = vrot.slane %v408, %v539
      %v541 = vsel %vm502, %v540, %v536
      %v542 = vlaneseq
      %v543 = vshrl.u32 %v542, 7
      %v544 = vsub.s32 %v478, %v543
      %v545 = vrot.slane %v409, %v544
      %v546 = vlaneseq
      %v547 = vshrl.u32 %v546, 7
      %v548 = vsub.s32 %v483, %v547
      %v549 = vrot.slane %v410, %v548
      %v550 = vsel %vm488, %v549, %v545
      %v551 = vlaneseq
      %v552 = vshrl.u32 %v551, 7
      %v553 = vsub.s32 %v490, %v552
      %v554 = vrot.slane %v411, %v553
      %v555 = vsel %vm495, %v554, %v550
      %v556 = vlaneseq
      %v557 = vshrl.u32 %v556, 7
      %v558 = vsub.s32 %v497, %v557
      %v559 = vrot.slane %v412, %v558
      %v560 = vsel %vm502, %v559, %v555
      %vm561 = vcmask 1041409
      %v562 = vsel %vm561, %v522, %v503
      %vm563 = vcmask 1042434
      %v564 = vsel %vm563, %v541, %v562
      %vm565 = vcmask 1043459
      %v566 = vsel %vm565, %v560, %v564
      %v584 = vlaneseq
      %v585 = vshrl.u32 %v584, 7
      %v586 = vsub.s32 %v478, %v585
      %v587 = vrot.slane %v415, %v586
      %v588 = vlaneseq
      %v589 = vshrl.u32 %v588, 7
      %v590 = vsub.s32 %v483, %v589
      %v591 = vrot.slane %v418, %v590
      %v592 = vsel %vm488, %v591, %v587
      %v593 = vlaneseq
      %v594 = vshrl.u32 %v593, 7
      %v595 = vsub.s32 %v490, %v594
      %v596 = vrot.slane %v421, %v595
      %v597 = vsel %vm495, %v596, %v592
      %v598 = vlaneseq
      %v599 = vshrl.u32 %v598, 7
      %v600 = vsub.s32 %v497, %v599
      %v601 = vrot.slane %v424, %v600
      %v602 = vsel %vm502, %v601, %v597
      %v603 = vlaneseq
      %v604 = vshrl.u32 %v603, 7
      %v605 = vsub.s32 %v478, %v604
      %v606 = vrot.slane %v427, %v605
      %v607 = vlaneseq
      %v608 = vshrl.u32 %v607, 7
      %v609 = vsub.s32 %v483, %v608
      %v610 = vrot.slane %v430, %v609
      %v611 = vsel %vm488, %v610, %v606
      %v612 = vlaneseq
      %v613 = vshrl.u32 %v612, 7
      %v614 = vsub.s32 %v490, %v613
      %v615 = vrot.slane %v433, %v614
      %v616 = vsel %vm495, %v615, %v611
      %v617 = vlaneseq
      %v618 = vshrl.u32 %v617, 7
      %v619 = vsub.s32 %v497, %v618
      %v620 = vrot.slane %v436, %v619
      %v621 = vsel %vm502, %v620, %v616
      %v622 = vlaneseq
      %v623 = vshrl.u32 %v622, 7
      %v624 = vsub.s32 %v478, %v623
      %v625 = vrot.slane %v439, %v624
      %v626 = vlaneseq
      %v627 = vshrl.u32 %v626, 7
      %v628 = vsub.s32 %v483, %v627
      %v629 = vrot.slane %v442, %v628
      %v630 = vsel %vm488, %v629, %v625
      %v631 = vlaneseq
      %v632 = vshrl.u32 %v631, 7
      %v633 = vsub.s32 %v490, %v632
      %v634 = vrot.slane %v445, %v633
      %v635 = vsel %vm495, %v634, %v630
      %v636 = vlaneseq
      %v637 = vshrl.u32 %v636, 7
      %v638 = vsub.s32 %v497, %v637
      %v639 = vrot.slane %v448, %v638
      %v640 = vsel %vm502, %v639, %v635
      %v641 = vlaneseq
      %v642 = vshrl.u32 %v641, 7
      %v643 = vsub.s32 %v478, %v642
      %v644 = vrot.slane %v451, %v643
      %v645 = vlaneseq
      %v646 = vshrl.u32 %v645, 7
      %v647 = vsub.s32 %v483, %v646
      %v648 = vrot.slane %v454, %v647
      %v649 = vsel %vm488, %v648, %v644
      %v650 = vlaneseq
      %v651 = vshrl.u32 %v650, 7
      %v652 = vsub.s32 %v490, %v651
      %v653 = vrot.slane %v457, %v652
      %v654 = vsel %vm495, %v653, %v649
      %v655 = vlaneseq
      %v656 = vshrl.u32 %v655, 7
      %v657 = vsub.s32 %v497, %v656
      %v658 = vrot.slane %v460, %v657
      %v659 = vsel %vm502, %v658, %v654
      %vm660 = vcmask 1045509
      %v661 = vsel %vm660, %v621, %v602
      %vm662 = vcmask 1046534
      %v663 = vsel %vm662, %v640, %v661
      %vm664 = vcmask 1047559
      %v665 = vsel %vm664, %v659, %v663
      %vm667 = vcmask 1043456
      %v668 = vsel %vm667, %v566, %v665
      %v669 = vld [vmem:[%s1] sm:$0xff]
      %v670 = vld [vmem:[%s1 + $0x8] sm:$0xff]
      %v671 = vld [vmem:[%s1 + $0x10] sm:$0xff]
      %v672 = vld [vmem:[%s1 + $0x18] sm:$0xff]
      %v673 = vld [vmem:[%s2] sm:$0x1]
      %v675 = vlaneseq
      %v676 = vshrl.u32 %v675, 7
      %v677 = vsub.s32 0, %v676
      %v678 = vrot.slane %v673, %v677
      %vm680 = vcmask 261120
      %v682 = vsel %vm680, %v668, 0
      %684 = vmatprep.subr.mxu0 0.0
      %685 = vmatpush1.msra.mxu0 %v669
      %686 = vmatprep.subr.mxu0 0.0
      %687 = vmatpush1.msra.mxu0 %v670
      %688 = vmatprep.subr.mxu0 0.0
      %689 = vmatpush1.msra.mxu0 %v671
      %690 = vmatprep.subr.mxu0 0.0
      %691 = vmatpush1.msra.mxu0 %v672
      %692 = vmatprep.subr.mxu0 0.0
      %693 = vmatpush1.msra.mxu0 0.0
      %694 = vmatprep.subr.mxu0 0.0
      %695 = vmatpush1.msra.mxu0 0.0
      %696 = vmatprep.subr.mxu0 0.0
      %697 = vmatpush1.msra.mxu0 0.0
      %698 = vmatprep.subr.mxu0 0.0
      %699 = vmatpush1.msra.mxu0 0.0
      %700 = vmatprep.subr.mxu0 0.0
      %701 = vmatpush1.msra.mxu0 0.0
      %702 = vmatprep.subr.mxu0 0.0
      %703 = vmatpush1.msra.mxu0 0.0
      %704 = vmatprep.subr.mxu0 0.0
      %705 = vmatpush1.msra.mxu0 0.0
      %706 = vmatprep.subr.mxu0 0.0
      %707 = vmatpush1.msra.mxu0 0.0
      %708 = vmatprep.subr.mxu0 0.0
      %709 = vmatpush1.msra.mxu0 0.0
      %710 = vmatprep.subr.mxu0 0.0
      %711 = vmatpush1.msra.mxu0 0.0
      %712 = vmatprep.subr.mxu0 0.0
      %713 = vmatpush1.msra.mxu0 0.0
      %714 = vmatprep.subr.mxu0 0.0
      %715 = vmatpush1.msra.mxu0 0.0
      %716 = vmatprep.subr.mxu0 0.0
      %717 = vmatpush1.msra.mxu0 0.0
      %718 = vmatprep.subr.mxu0 0.0
      %719 = vmatpush1.msra.mxu0 0.0
      %720 = vmatprep.subr.mxu0 0.0
      %721 = vmatpush1.msra.mxu0 0.0
      %722 = vmatprep.subr.mxu0 0.0
      %723 = vmatpush1.msra.mxu0 0.0
      %724 = vmatprep.subr.mxu0 0.0
      %725 = vmatpush1.msra.mxu0 0.0
      %726 = vmatprep.subr.mxu0 0.0
      %727 = vmatpush1.msra.mxu0 0.0
      %728 = vmatprep.subr.mxu0 0.0
      %729 = vmatpush1.msra.mxu0 0.0
      %730 = vmatprep.subr.mxu0 0.0
      %731 = vmatpush1.msra.mxu0 0.0
      %732 = vmatprep.subr.mxu0 0.0
      %733 = vmatpush1.msra.mxu0 0.0
      %734 = vmatprep.subr.mxu0 0.0
      %735 = vmatpush1.msra.mxu0 0.0
      %736 = vmatprep.subr.mxu0 0.0
      %737 = vmatpush1.msra.mxu0 0.0
      %738 = vmatprep.subr.mxu0 0.0
      %739 = vmatpush1.msra.mxu0 0.0
      %740 = vmatprep.subr.mxu0 0.0
      %741 = vmatpush1.msra.mxu0 0.0
      %742 = vmatprep.subr.mxu0 0.0
      %743 = vmatpush1.msra.mxu0 0.0
      %744 = vmatprep.subr.mxu0 0.0
      %745 = vmatpush1.msra.mxu0 0.0
      %746 = vmatprep.subr.mxu0 0.0
      %747 = vmatpush1.msra.mxu0 0.0
      %748 = vmatprep.mubr.f32.mxu0 0.0
      %749 = vmatmul.mubr.f32.gmra.mrb[0].mxu0 %v682
      %v750 = vpop.f32.mrb[0].mxu0
      %v751 = vadd.f32 %v678, %v750
      %v752 = vpop.f32.mrb[0].mxu0
      %753 = vdwg.mxu0
      %v754 = vmax.f32 %v751, 0.0
      %v755 = vld [vmem:[%s3] sm:$0x3]
      %v756 = vld [vmem:[%s4] sm:$0x1]
      %v758 = vlaneseq
      %v759 = vshrl.u32 %v758, 7
      %v760 = vsub.s32 0, %v759
      %v761 = vrot.slane %v756, %v760
      %vm763 = vcmask 15360
      %v765 = vsel %vm763, %v754, 0
      %vm767 = vcmask 1041408
      %v769 = vsel %vm767, %v755, 0
      %771 = vmatprep.subr.mxu0 0.0
      %772 = vmatpush1.msra.mxu0 %v769
      %773 = vmatprep.subr.mxu0 0.0
      %774 = vmatpush1.msra.mxu0 0.0
      %775 = vmatprep.subr.mxu0 0.0
      %776 = vmatpush1.msra.mxu0 0.0
      %777 = vmatprep.subr.mxu0 0.0
      %778 = vmatpush1.msra.mxu0 0.0
      %779 = vmatprep.subr.mxu0 0.0
      %780 = vmatpush1.msra.mxu0 0.0
      %781 = vmatprep.subr.mxu0 0.0
      %782 = vmatpush1.msra.mxu0 0.0
      %783 = vmatprep.subr.mxu0 0.0
      %784 = vmatpush1.msra.mxu0 0.0
      %785 = vmatprep.subr.mxu0 0.0
      %786 = vmatpush1.msra.mxu0 0.0
      %787 = vmatprep.subr.mxu0 0.0
      %788 = vmatpush1.msra.mxu0 0.0
      %789 = vmatprep.subr.mxu0 0.0
      %790 = vmatpush1.msra.mxu0 0.0
      %791 = vmatprep.subr.mxu0 0.0
      %792 = vmatpush1.msra.mxu0 0.0
      %793 = vmatprep.subr.mxu0 0.0
      %794 = vmatpush1.msra.mxu0 0.0
      %795 = vmatprep.subr.mxu0 0.0
      %796 = vmatpush1.msra.mxu0 0.0
      %797 = vmatprep.subr.mxu0 0.0
      %798 = vmatpush1.msra.mxu0 0.0
      %799 = vmatprep.subr.mxu0 0.0
      %800 = vmatpush1.msra.mxu0 0.0
      %801 = vmatprep.subr.mxu0 0.0
      %802 = vmatpush1.msra.mxu0 0.0
      %803 = vmatprep.subr.mxu0 0.0
      %804 = vmatpush1.msra.mxu0 0.0
      %805 = vmatprep.subr.mxu0 0.0
      %806 = vmatpush1.msra.mxu0 0.0
      %807 = vmatprep.subr.mxu0 0.0
      %808 = vmatpush1.msra.mxu0 0.0
      %809 = vmatprep.subr.mxu0 0.0
      %810 = vmatpush1.msra.mxu0 0.0
      %811 = vmatprep.subr.mxu0 0.0
      %812 = vmatpush1.msra.mxu0 0.0
      %813 = vmatprep.subr.mxu0 0.0
      %814 = vmatpush1.msra.mxu0 0.0
      %815 = vmatprep.subr.mxu0 0.0
      %816 = vmatpush1.msra.mxu0 0.0
      %817 = vmatprep.subr.mxu0 0.0
      %818 = vmatpush1.msra.mxu0 0.0
      %819 = vmatprep.subr.mxu0 0.0
      %820 = vmatpush1.msra.mxu0 0.0
      %821 = vmatprep.subr.mxu0 0.0
      %822 = vmatpush1.msra.mxu0 0.0
      %823 = vmatprep.subr.mxu0 0.0
      %824 = vmatpush1.msra.mxu0 0.0
      %825 = vmatprep.subr.mxu0 0.0
      %826 = vmatpush1.msra.mxu0 0.0
      %827 = vmatprep.subr.mxu0 0.0
      %828 = vmatpush1.msra.mxu0 0.0
      %829 = vmatprep.subr.mxu0 0.0
      %830 = vmatpush1.msra.mxu0 0.0
      %831 = vmatprep.subr.mxu0 0.0
      %832 = vmatpush1.msra.mxu0 0.0
      %833 = vmatprep.subr.mxu0 0.0
      %834 = vmatpush1.msra.mxu0 0.0
      %835 = vmatprep.mubr.f32.mxu0 0.0
      %836 = vmatmul.mubr.f32.gmra.mrb[0].mxu0 %v765
      %v837 = vpop.f32.mrb[0].mxu0
      %v838 = vadd.f32 %v761, %v837
      %v839 = vpop.f32.mrb[0].mxu0
      %840 = vdwg.mxu0
      %v842 = vrot.slane %v838, 4
      %v844 = vadd.f32 %v838, %v842
      %v845 = vxor.u32 %v844, 2147483648
      %v846 = vmul.f32 %v845, 1.442695
      %v847 = vpow.pop %v846
      %v848 = vadd.f32 %v847, 1.0
      %v849 = vrcp.pop %v848
      %v850 = vmul.f32 1.0, %v849
      %v851 = vlaneseq
      %v852 = vshrl.u32 %v851, 7
      %v853 = vsub.s32 0, %v852
      %v854 = vrot.slane %v850, %v853
      %856 = vbcast.lane.b32.xlu0 %v854, 256
      %v857 = vpop.permute.xlu0 %856
      %s859 = sor.u32 256, 8
      %860 = vbcast.lane.b32.xlu0 %v854, %s859
      %v861 = vpop.permute.xlu0 %860
      %s863 = sor.u32 256, 16
      %864 = vbcast.lane.b32.xlu0 %v854, %s863
      %v865 = vpop.permute.xlu0 %864
      %s867 = sor.u32 256, 24
      %868 = vbcast.lane.b32.xlu0 %v854, %s867
      %v869 = vpop.permute.xlu0 %868
      %v870 = vlaneseq
      %v871 = vshrl.u32 %v870, 7
      %v872 = vsub.s32 1, %v871
      %v873 = vrot.slane %v850, %v872
      %875 = vbcast.lane.b32.xlu0 %v873, 256
      %v876 = vpop.permute.xlu0 %875
      %s878 = sor.u32 256, 8
      %879 = vbcast.lane.b32.xlu0 %v873, %s878
      %v880 = vpop.permute.xlu0 %879
      %s882 = sor.u32 256, 16
      %883 = vbcast.lane.b32.xlu0 %v873, %s882
      %v884 = vpop.permute.xlu0 %883
      %s886 = sor.u32 256, 24
      %887 = vbcast.lane.b32.xlu0 %v873, %s886
      %v888 = vpop.permute.xlu0 %887
      %v889 = vlaneseq
      %v890 = vshrl.u32 %v889, 7
      %v891 = vsub.s32 2, %v890
      %v892 = vrot.slane %v850, %v891
      %894 = vbcast.lane.b32.xlu0 %v892, 256
      %v895 = vpop.permute.xlu0 %894
      %s897 = sor.u32 256, 8
      %898 = vbcast.lane.b32.xlu0 %v892, %s897
      %v899 = vpop.permute.xlu0 %898
      %s901 = sor.u32 256, 16
      %902 = vbcast.lane.b32.xlu0 %v892, %s901
      %v903 = vpop.permute.xlu0 %902
      %s905 = sor.u32 256, 24
      %906 = vbcast.lane.b32.xlu0 %v892, %s905
      %v907 = vpop.permute.xlu0 %906
      %v908 = vlaneseq
      %v909 = vshrl.u32 %v908, 7
      %v910 = vsub.s32 3, %v909
      %v911 = vrot.slane %v850, %v910
      %913 = vbcast.lane.b32.xlu0 %v911, 256
      %v914 = vpop.permute.xlu0 %913
      %s916 = sor.u32 256, 8
      %917 = vbcast.lane.b32.xlu0 %v911, %s916
      %v918 = vpop.permute.xlu0 %917
      %s920 = sor.u32 256, 16
      %921 = vbcast.lane.b32.xlu0 %v911, %s920
      %v922 = vpop.permute.xlu0 %921
      %s924 = sor.u32 256, 24
      %925 = vbcast.lane.b32.xlu0 %v911, %s924
      %v926 = vpop.permute.xlu0 %925
      %v927 = vmul.f32 %v316, %v857
      %v928 = vmul.f32 %v317, %v857
      %v929 = vmul.f32 %v318, %v861
      %v930 = vmul.f32 %v319, %v861
      %v931 = vmul.f32 %v320, %v865
      %v932 = vmul.f32 %v321, %v865
      %v933 = vmul.f32 %v322, %v869
      %v934 = vmul.f32 %v323, %v869
      %v935 = vmul.f32 %v324, %v876
      %v936 = vmul.f32 %v325, %v876
      %v937 = vmul.f32 %v326, %v880
      %v938 = vmul.f32 %v327, %v880
      %v939 = vmul.f32 %v328, %v884
      %v940 = vmul.f32 %v329, %v884
      %v941 = vmul.f32 %v330, %v888
      %v942 = vmul.f32 %v331, %v888
      %v943 = vmul.f32 %v332, %v895
      %v944 = vmul.f32 %v333, %v895
      %v945 = vmul.f32 %v334, %v899
      %v946 = vmul.f32 %v335, %v899
      %v947 = vmul.f32 %v336, %v903
      %v948 = vmul.f32 %v337, %v903
      %v949 = vmul.f32 %v338, %v907
      %v950 = vmul.f32 %v339, %v907
      %v951 = vmul.f32 %v340, %v914
      %v952 = vmul.f32 %v341, %v914
      %v953 = vmul.f32 %v342, %v918
      %v954 = vmul.f32 %v343, %v918
      %v955 = vmul.f32 %v344, %v922
      %v956 = vmul.f32 %v345, %v922
      %v957 = vmul.f32 %v346, %v926
      %v958 = vmul.f32 %v347, %v926
      %v959 = vadd.f32 %v927, %v929
      %v960 = vadd.f32 %v959, %v931
      %v961 = vadd.f32 %v960, %v933
      %v962 = vrot.slane %v961, 4
      %v963 = vadd.f32 %v961, %v962
      %v964 = vrot.slane %v963, 2
      %v965 = vadd.f32 %v963, %v964
      %v966 = vrot.slane %v965, 1
      %v967 = vadd.f32 %v965, %v966
      %v968 = vadd.f32 %v928, %v930
      %v969 = vadd.f32 %v968, %v932
      %v970 = vadd.f32 %v969, %v934
      %v971 = vrot.slane %v970, 4
      %v972 = vadd.f32 %v970, %v971
      %v973 = vrot.slane %v972, 2
      %v974 = vadd.f32 %v972, %v973
      %v975 = vrot.slane %v974, 1
      %v976 = vadd.f32 %v974, %v975
      %v977 = vadd.f32 %v935, %v937
      %v978 = vadd.f32 %v977, %v939
      %v979 = vadd.f32 %v978, %v941
      %v980 = vrot.slane %v979, 4
      %v981 = vadd.f32 %v979, %v980
      %v982 = vrot.slane %v981, 2
      %v983 = vadd.f32 %v981, %v982
      %v984 = vrot.slane %v983, 1
      %v985 = vadd.f32 %v983, %v984
      %v986 = vadd.f32 %v936, %v938
      %v987 = vadd.f32 %v986, %v940
      %v988 = vadd.f32 %v987, %v942
      %v989 = vrot.slane %v988, 4
      %v990 = vadd.f32 %v988, %v989
      %v991 = vrot.slane %v990, 2
      %v992 = vadd.f32 %v990, %v991
      %v993 = vrot.slane %v992, 1
      %v994 = vadd.f32 %v992, %v993
      %v995 = vadd.f32 %v943, %v945
      %v996 = vadd.f32 %v995, %v947
      %v997 = vadd.f32 %v996, %v949
      %v998 = vrot.slane %v997, 4
      %v999 = vadd.f32 %v997, %v998
      %v1000 = vrot.slane %v999, 2
      %v1001 = vadd.f32 %v999, %v1000
      %v1002 = vrot.slane %v1001, 1
      %v1003 = vadd.f32 %v1001, %v1002
      %v1004 = vadd.f32 %v944, %v946
      %v1005 = vadd.f32 %v1004, %v948
      %v1006 = vadd.f32 %v1005, %v950
      %v1007 = vrot.slane %v1006, 4
      %v1008 = vadd.f32 %v1006, %v1007
      %v1009 = vrot.slane %v1008, 2
      %v1010 = vadd.f32 %v1008, %v1009
      %v1011 = vrot.slane %v1010, 1
      %v1012 = vadd.f32 %v1010, %v1011
      %v1013 = vadd.f32 %v951, %v953
      %v1014 = vadd.f32 %v1013, %v955
      %v1015 = vadd.f32 %v1014, %v957
      %v1016 = vrot.slane %v1015, 4
      %v1017 = vadd.f32 %v1015, %v1016
      %v1018 = vrot.slane %v1017, 2
      %v1019 = vadd.f32 %v1017, %v1018
      %v1020 = vrot.slane %v1019, 1
      %v1021 = vadd.f32 %v1019, %v1020
      %v1022 = vadd.f32 %v952, %v954
      %v1023 = vadd.f32 %v1022, %v956
      %v1024 = vadd.f32 %v1023, %v958
      %v1025 = vrot.slane %v1024, 4
      %v1026 = vadd.f32 %v1024, %v1025
      %v1027 = vrot.slane %v1026, 2
      %v1028 = vadd.f32 %v1026, %v1027
      %v1029 = vrot.slane %v1028, 1
      %v1030 = vadd.f32 %v1028, %v1029
      %v1031 = vrcp.pop 32.0
      %v1032 = vmul.f32 %v967, %v1031
      %v1033 = vmul.f32 %v976, %v1031
      %v1034 = vmul.f32 %v985, %v1031
      %v1035 = vmul.f32 %v994, %v1031
      %v1036 = vmul.f32 %v1003, %v1031
      %v1037 = vmul.f32 %v1012, %v1031
      %v1038 = vmul.f32 %v1021, %v1031
      %v1039 = vmul.f32 %v1030, %v1031
      %v1040 = vmax.f32 %v927, %v929
      %v1041 = vmax.f32 %v1040, %v931
      %v1042 = vmax.f32 %v1041, %v933
      %v1043 = vrot.slane %v1042, 4
      %v1044 = vmax.f32 %v1042, %v1043
      %v1045 = vrot.slane %v1044, 2
      %v1046 = vmax.f32 %v1044, %v1045
      %v1047 = vrot.slane %v1046, 1
      %v1048 = vmax.f32 %v1046, %v1047
      %v1049 = vmax.f32 %v928, %v930
      %v1050 = vmax.f32 %v1049, %v932
      %v1051 = vmax.f32 %v1050, %v934
      %v1052 = vrot.slane %v1051, 4
      %v1053 = vmax.f32 %v1051, %v1052
      %v1054 = vrot.slane %v1053, 2
      %v1055 = vmax.f32 %v1053, %v1054
      %v1056 = vrot.slane %v1055, 1
      %v1057 = vmax.f32 %v1055, %v1056
      %v1058 = vmax.f32 %v935, %v937
      %v1059 = vmax.f32 %v1058, %v939
      %v1060 = vmax.f32 %v1059, %v941
      %v1061 = vrot.slane %v1060, 4
      %v1062 = vmax.f32 %v1060, %v1061
      %v1063 = vrot.slane %v1062, 2
      %v1064 = vmax.f32 %v1062, %v1063
      %v1065 = vrot.slane %v1064, 1
      %v1066 = vmax.f32 %v1064, %v1065
      %v1067 = vmax.f32 %v936, %v938
      %v1068 = vmax.f32 %v1067, %v940
      %v1069 = vmax.f32 %v1068, %v942
      %v1070 = vrot.slane %v1069, 4
      %v1071 = vmax.f32 %v1069, %v1070
      %v1072 = vrot.slane %v1071, 2
      %v1073 = vmax.f32 %v1071, %v1072
      %v1074 = vrot.slane %v1073, 1
      %v1075 = vmax.f32 %v1073, %v1074
      %v1076 = vmax.f32 %v943, %v945
      %v1077 = vmax.f32 %v1076, %v947
      %v1078 = vmax.f32 %v1077, %v949
      %v1079 = vrot.slane %v1078, 4
      %v1080 = vmax.f32 %v1078, %v1079
      %v1081 = vrot.slane %v1080, 2
      %v1082 = vmax.f32 %v1080, %v1081
      %v1083 = vrot.slane %v1082, 1
      %v1084 = vmax.f32 %v1082, %v1083
      %v1085 = vmax.f32 %v944, %v946
      %v1086 = vmax.f32 %v1085, %v948
      %v1087 = vmax.f32 %v1086, %v950
      %v1088 = vrot.slane %v1087, 4
      %v1089 = vmax.f32 %v1087, %v1088
      %v1090 = vrot.slane %v1089, 2
      %v1091 = vmax.f32 %v1089, %v1090
      %v1092 = vrot.slane %v1091, 1
      %v1093 = vmax.f32 %v1091, %v1092
      %v1094 = vmax.f32 %v951, %v953
      %v1095 = vmax.f32 %v1094, %v955
      %v1096 = vmax.f32 %v1095, %v957
      %v1097 = vrot.slane %v1096, 4
      %v1098 = vmax.f32 %v1096, %v1097
      %v1099 = vrot.slane %v1098, 2
      %v1100 = vmax.f32 %v1098, %v1099
      %v1101 = vrot.slane %v1100, 1
      %v1102 = vmax.f32 %v1100, %v1101
      %v1103 = vmax.f32 %v952, %v954
      %v1104 = vmax.f32 %v1103, %v956
      %v1105 = vmax.f32 %v1104, %v958
      %v1106 = vrot.slane %v1105, 4
      %v1107 = vmax.f32 %v1105, %v1106
      %v1108 = vrot.slane %v1107, 2
      %v1109 = vmax.f32 %v1107, %v1108
      %v1110 = vrot.slane %v1109, 1
      %v1111 = vmax.f32 %v1109, %v1110
      %1112 = vst [vmem:[%s314] sm:$0xff] %v927
      %1113 = vst [vmem:[%s314 + $0x8] sm:$0xff] %v928
      %1114 = vst [vmem:[%s314 + $0x10] sm:$0xff] %v929
      %1115 = vst [vmem:[%s314 + $0x18] sm:$0xff] %v930
      %1116 = vst [vmem:[%s314 + $0x20] sm:$0xff] %v931
      %1117 = vst [vmem:[%s314 + $0x28] sm:$0xff] %v932
      %1118 = vst [vmem:[%s314 + $0x30] sm:$0xff] %v933
      %1119 = vst [vmem:[%s314 + $0x38] sm:$0xff] %v934
      %1120 = vst [vmem:[%s314 + $0x40] sm:$0xff] %v935
      %1121 = vst [vmem:[%s314 + $0x48] sm:$0xff] %v936
      %1122 = vst [vmem:[%s314 + $0x50] sm:$0xff] %v937
      %1123 = vst [vmem:[%s314 + $0x58] sm:$0xff] %v938
      %1124 = vst [vmem:[%s314 + $0x60] sm:$0xff] %v939
      %1125 = vst [vmem:[%s314 + $0x68] sm:$0xff] %v940
      %1126 = vst [vmem:[%s314 + $0x70] sm:$0xff] %v941
      %1127 = vst [vmem:[%s314 + $0x78] sm:$0xff] %v942
      %1128 = vst [vmem:[%s314 + $0x80] sm:$0xff] %v943
      %1129 = vst [vmem:[%s314 + $0x88] sm:$0xff] %v944
      %1130 = vst [vmem:[%s314 + $0x90] sm:$0xff] %v945
      %1131 = vst [vmem:[%s314 + $0x98] sm:$0xff] %v946
      %1132 = vst [vmem:[%s314 + $0xa0] sm:$0xff] %v947
      %1133 = vst [vmem:[%s314 + $0xa8] sm:$0xff] %v948
      %1134 = vst [vmem:[%s314 + $0xb0] sm:$0xff] %v949
      %1135 = vst [vmem:[%s314 + $0xb8] sm:$0xff] %v950
      %1136 = vst [vmem:[%s314 + $0xc0] sm:$0xff] %v951
      %1137 = vst [vmem:[%s314 + $0xc8] sm:$0xff] %v952
      %1138 = vst [vmem:[%s314 + $0xd0] sm:$0xff] %v953
      %1139 = vst [vmem:[%s314 + $0xd8] sm:$0xff] %v954
      %1140 = vst [vmem:[%s314 + $0xe0] sm:$0xff] %v955
      %1141 = vst [vmem:[%s314 + $0xe8] sm:$0xff] %v956
      %1142 = vst [vmem:[%s314 + $0xf0] sm:$0xff] %v957
      %1143 = vst [vmem:[%s314 + $0xf8] sm:$0xff] %v958
      %v1144 = vld [vmem:[%s5] sm:$0xff]
      %v1145 = vld [vmem:[%s5 + $0x8] sm:$0xff]
      %v1146 = vld [vmem:[%s5 + $0x10] sm:$0xff]
      %v1147 = vld [vmem:[%s5 + $0x18] sm:$0xff]
      %v1148 = vld [vmem:[%s5 + $0x20] sm:$0xff]
      %v1149 = vld [vmem:[%s5 + $0x28] sm:$0xff]
      %v1150 = vld [vmem:[%s5 + $0x30] sm:$0xff]
      %v1151 = vld [vmem:[%s5 + $0x38] sm:$0xff]
      %v1152 = vld [vmem:[%s5 + $0x40] sm:$0xff]
      %v1153 = vld [vmem:[%s5 + $0x48] sm:$0xff]
      %v1154 = vld [vmem:[%s5 + $0x50] sm:$0xff]
      %v1155 = vld [vmem:[%s5 + $0x58] sm:$0xff]
      %v1156 = vld [vmem:[%s5 + $0x60] sm:$0xff]
      %v1157 = vld [vmem:[%s5 + $0x68] sm:$0xff]
      %v1158 = vld [vmem:[%s5 + $0x70] sm:$0xff]
      %v1159 = vld [vmem:[%s5 + $0x78] sm:$0xff]
      %v1160 = vld [vmem:[%s5 + $0x80] sm:$0xff]
      %v1161 = vld [vmem:[%s5 + $0x88] sm:$0xff]
      %v1162 = vld [vmem:[%s5 + $0x90] sm:$0xff]
      %v1163 = vld [vmem:[%s5 + $0x98] sm:$0xff]
      %v1164 = vld [vmem:[%s5 + $0xa0] sm:$0xff]
      %v1165 = vld [vmem:[%s5 + $0xa8] sm:$0xff]
      %v1166 = vld [vmem:[%s5 + $0xb0] sm:$0xff]
      %v1167 = vld [vmem:[%s5 + $0xb8] sm:$0xff]
      %v1168 = vld [vmem:[%s5 + $0xc0] sm:$0xff]
      %v1169 = vld [vmem:[%s5 + $0xc8] sm:$0xff]
      %v1170 = vld [vmem:[%s5 + $0xd0] sm:$0xff]
      %v1171 = vld [vmem:[%s5 + $0xd8] sm:$0xff]
      %v1172 = vld [vmem:[%s5 + $0xe0] sm:$0xff]
      %v1173 = vld [vmem:[%s5 + $0xe8] sm:$0xff]
      %v1174 = vld [vmem:[%s5 + $0xf0] sm:$0xff]
      %v1175 = vld [vmem:[%s5 + $0xf8] sm:$0xff]
      %v1176 = vld [vmem:[%s5 + $0x100] sm:$0xff]
      %v1177 = vld [vmem:[%s5 + $0x108] sm:$0xff]
      %v1178 = vld [vmem:[%s5 + $0x110] sm:$0xff]
      %v1179 = vld [vmem:[%s5 + $0x118] sm:$0xff]
      %v1180 = vld [vmem:[%s5 + $0x120] sm:$0xff]
      %v1181 = vld [vmem:[%s5 + $0x128] sm:$0xff]
      %v1182 = vld [vmem:[%s5 + $0x130] sm:$0xff]
      %v1183 = vld [vmem:[%s5 + $0x138] sm:$0xff]
      %v1184 = vld [vmem:[%s5 + $0x140] sm:$0xff]
      %v1185 = vld [vmem:[%s5 + $0x148] sm:$0xff]
      %v1186 = vld [vmem:[%s5 + $0x150] sm:$0xff]
      %v1187 = vld [vmem:[%s5 + $0x158] sm:$0xff]
      %v1188 = vld [vmem:[%s5 + $0x160] sm:$0xff]
      %v1189 = vld [vmem:[%s5 + $0x168] sm:$0xff]
      %v1190 = vld [vmem:[%s5 + $0x170] sm:$0xff]
      %v1191 = vld [vmem:[%s5 + $0x178] sm:$0xff]
      %v1192 = vld [vmem:[%s5 + $0x180] sm:$0xff]
      %v1193 = vld [vmem:[%s5 + $0x188] sm:$0xff]
      %v1194 = vld [vmem:[%s5 + $0x190] sm:$0xff]
      %v1195 = vld [vmem:[%s5 + $0x198] sm:$0xff]
      %v1196 = vld [vmem:[%s5 + $0x1a0] sm:$0xff]
      %v1197 = vld [vmem:[%s5 + $0x1a8] sm:$0xff]
      %v1198 = vld [vmem:[%s5 + $0x1b0] sm:$0xff]
      %v1199 = vld [vmem:[%s5 + $0x1b8] sm:$0xff]
      %v1200 = vld [vmem:[%s5 + $0x1c0] sm:$0xff]
      %v1201 = vld [vmem:[%s5 + $0x1c8] sm:$0xff]
      %v1202 = vld [vmem:[%s5 + $0x1d0] sm:$0xff]
      %v1203 = vld [vmem:[%s5 + $0x1d8] sm:$0xff]
      %v1204 = vld [vmem:[%s5 + $0x1e0] sm:$0xff]
      %v1205 = vld [vmem:[%s5 + $0x1e8] sm:$0xff]
      %v1206 = vld [vmem:[%s5 + $0x1f0] sm:$0xff]
      %v1207 = vld [vmem:[%s5 + $0x1f8] sm:$0xff]
      %v1208 = vld [vmem:[%s6] sm:$0xff]
      %v1209 = vld [vmem:[%s6 + $0x8] sm:$0xff]
      %v1210 = vld [vmem:[%s6 + $0x10] sm:$0xff]
      %v1211 = vld [vmem:[%s6 + $0x18] sm:$0xff]
      %v1212 = vld [vmem:[%s6 + $0x20] sm:$0xff]
      %v1213 = vld [vmem:[%s6 + $0x28] sm:$0xff]
      %v1214 = vld [vmem:[%s6 + $0x30] sm:$0xff]
      %v1215 = vld [vmem:[%s6 + $0x38] sm:$0xff]
      %v1216 = vld [vmem:[%s6 + $0x40] sm:$0xff]
      %v1217 = vld [vmem:[%s6 + $0x48] sm:$0xff]
      %v1218 = vld [vmem:[%s6 + $0x50] sm:$0xff]
      %v1219 = vld [vmem:[%s6 + $0x58] sm:$0xff]
      %v1220 = vld [vmem:[%s6 + $0x60] sm:$0xff]
      %v1221 = vld [vmem:[%s6 + $0x68] sm:$0xff]
      %v1222 = vld [vmem:[%s6 + $0x70] sm:$0xff]
      %v1223 = vld [vmem:[%s6 + $0x78] sm:$0xff]
      %v1224 = vld [vmem:[%s6 + $0x80] sm:$0xff]
      %v1225 = vld [vmem:[%s6 + $0x88] sm:$0xff]
      %v1226 = vld [vmem:[%s6 + $0x90] sm:$0xff]
      %v1227 = vld [vmem:[%s6 + $0x98] sm:$0xff]
      %v1228 = vld [vmem:[%s6 + $0xa0] sm:$0xff]
      %v1229 = vld [vmem:[%s6 + $0xa8] sm:$0xff]
      %v1230 = vld [vmem:[%s6 + $0xb0] sm:$0xff]
      %v1231 = vld [vmem:[%s6 + $0xb8] sm:$0xff]
      %v1232 = vld [vmem:[%s6 + $0xc0] sm:$0xff]
      %v1233 = vld [vmem:[%s6 + $0xc8] sm:$0xff]
      %v1234 = vld [vmem:[%s6 + $0xd0] sm:$0xff]
      %v1235 = vld [vmem:[%s6 + $0xd8] sm:$0xff]
      %v1236 = vld [vmem:[%s6 + $0xe0] sm:$0xff]
      %v1237 = vld [vmem:[%s6 + $0xe8] sm:$0xff]
      %v1238 = vld [vmem:[%s6 + $0xf0] sm:$0xff]
      %v1239 = vld [vmem:[%s6 + $0xf8] sm:$0xff]
      %v1240 = vld [vmem:[%s6 + $0x100] sm:$0xff]
      %v1241 = vld [vmem:[%s6 + $0x108] sm:$0xff]
      %v1242 = vld [vmem:[%s6 + $0x110] sm:$0xff]
      %v1243 = vld [vmem:[%s6 + $0x118] sm:$0xff]
      %v1244 = vld [vmem:[%s6 + $0x120] sm:$0xff]
      %v1245 = vld [vmem:[%s6 + $0x128] sm:$0xff]
      %v1246 = vld [vmem:[%s6 + $0x130] sm:$0xff]
      %v1247 = vld [vmem:[%s6 + $0x138] sm:$0xff]
      %v1248 = vld [vmem:[%s6 + $0x140] sm:$0xff]
      %v1249 = vld [vmem:[%s6 + $0x148] sm:$0xff]
      %v1250 = vld [vmem:[%s6 + $0x150] sm:$0xff]
      %v1251 = vld [vmem:[%s6 + $0x158] sm:$0xff]
      %v1252 = vld [vmem:[%s6 + $0x160] sm:$0xff]
      %v1253 = vld [vmem:[%s6 + $0x168] sm:$0xff]
      %v1254 = vld [vmem:[%s6 + $0x170] sm:$0xff]
      %v1255 = vld [vmem:[%s6 + $0x178] sm:$0xff]
      %v1256 = vld [vmem:[%s6 + $0x180] sm:$0xff]
      %v1257 = vld [vmem:[%s6 + $0x188] sm:$0xff]
      %v1258 = vld [vmem:[%s6 + $0x190] sm:$0xff]
      %v1259 = vld [vmem:[%s6 + $0x198] sm:$0xff]
      %v1260 = vld [vmem:[%s6 + $0x1a0] sm:$0xff]
      %v1261 = vld [vmem:[%s6 + $0x1a8] sm:$0xff]
      %v1262 = vld [vmem:[%s6 + $0x1b0] sm:$0xff]
      %v1263 = vld [vmem:[%s6 + $0x1b8] sm:$0xff]
      %v1264 = vld [vmem:[%s6 + $0x1c0] sm:$0xff]
      %v1265 = vld [vmem:[%s6 + $0x1c8] sm:$0xff]
      %v1266 = vld [vmem:[%s6 + $0x1d0] sm:$0xff]
      %v1267 = vld [vmem:[%s6 + $0x1d8] sm:$0xff]
      %v1268 = vld [vmem:[%s6 + $0x1e0] sm:$0xff]
      %v1269 = vld [vmem:[%s6 + $0x1e8] sm:$0xff]
      %v1270 = vld [vmem:[%s6 + $0x1f0] sm:$0xff]
      %v1271 = vld [vmem:[%s6 + $0x1f8] sm:$0xff]
      %v1280 = vsel %vm561, %v1066, %v1048
      %v1281 = vsel %vm563, %v1084, %v1280
      %v1282 = vsel %vm565, %v1102, %v1281
      %v1283 = vsel %vm561, %v1075, %v1057
      %v1284 = vsel %vm563, %v1093, %v1283
      %v1285 = vsel %vm565, %v1111, %v1284
      %1288 = vmatprep.subr.mxu0 %v1209
      %1289 = vmatpush1.msra.mxu0 %v1208
      %1290 = vmatprep.subr.mxu0 %v1211
      %1291 = vmatpush1.msra.mxu0 %v1210
      %1292 = vmatprep.subr.mxu0 %v1213
      %1293 = vmatpush1.msra.mxu0 %v1212
      %1294 = vmatprep.subr.mxu0 %v1215
      %1295 = vmatpush1.msra.mxu0 %v1214
      %1296 = vmatprep.subr.mxu0 %v1217
      %1297 = vmatpush1.msra.mxu0 %v1216
      %1298 = vmatprep.subr.mxu0 %v1219
      %1299 = vmatpush1.msra.mxu0 %v1218
      %1300 = vmatprep.subr.mxu0 %v1221
      %1301 = vmatpush1.msra.mxu0 %v1220
      %1302 = vmatprep.subr.mxu0 %v1223
      %1303 = vmatpush1.msra.mxu0 %v1222
      %1304 = vmatprep.subr.mxu0 %v1225
      %1305 = vmatpush1.msra.mxu0 %v1224
      %1306 = vmatprep.subr.mxu0 %v1227
      %1307 = vmatpush1.msra.mxu0 %v1226
      %1308 = vmatprep.subr.mxu0 %v1229
      %1309 = vmatpush1.msra.mxu0 %v1228
      %1310 = vmatprep.subr.mxu0 %v1231
      %1311 = vmatpush1.msra.mxu0 %v1230
      %1312 = vmatprep.subr.mxu0 %v1233
      %1313 = vmatpush1.msra.mxu0 %v1232
      %1314 = vmatprep.subr.mxu0 %v1235
      %1315 = vmatpush1.msra.mxu0 %v1234
      %1316 = vmatprep.subr.mxu0 %v1237
      %1317 = vmatpush1.msra.mxu0 %v1236
      %1318 = vmatprep.subr.mxu0 %v1239
      %1319 = vmatpush1.msra.mxu0 %v1238
      %1320 = vmatprep.subr.mxu0 %v1241
      %1321 = vmatpush1.msra.mxu0 %v1240
      %1322 = vmatprep.subr.mxu0 %v1243
      %1323 = vmatpush1.msra.mxu0 %v1242
      %1324 = vmatprep.subr.mxu0 %v1245
      %1325 = vmatpush1.msra.mxu0 %v1244
      %1326 = vmatprep.subr.mxu0 %v1247
      %1327 = vmatpush1.msra.mxu0 %v1246
      %1328 = vmatprep.subr.mxu0 %v1249
      %1329 = vmatpush1.msra.mxu0 %v1248
      %1330 = vmatprep.subr.mxu0 %v1251
      %1331 = vmatpush1.msra.mxu0 %v1250
      %1332 = vmatprep.subr.mxu0 %v1253
      %1333 = vmatpush1.msra.mxu0 %v1252
      %1334 = vmatprep.subr.mxu0 %v1255
      %1335 = vmatpush1.msra.mxu0 %v1254
      %1336 = vmatprep.subr.mxu0 %v1257
      %1337 = vmatpush1.msra.mxu0 %v1256
      %1338 = vmatprep.subr.mxu0 %v1259
      %1339 = vmatpush1.msra.mxu0 %v1258
      %1340 = vmatprep.subr.mxu0 %v1261
      %1341 = vmatpush1.msra.mxu0 %v1260
      %1342 = vmatprep.subr.mxu0 %v1263
      %1343 = vmatpush1.msra.mxu0 %v1262
      %1344 = vmatprep.subr.mxu0 %v1265
      %1345 = vmatpush1.msra.mxu0 %v1264
      %1346 = vmatprep.subr.mxu0 %v1267
      %1347 = vmatpush1.msra.mxu0 %v1266
      %1348 = vmatprep.subr.mxu0 %v1269
      %1349 = vmatpush1.msra.mxu0 %v1268
      %1350 = vmatprep.subr.mxu0 %v1271
      %1351 = vmatpush1.msra.mxu0 %v1270
      %1352 = vmatprep.mubr.f32.mxu0 %v1285
      %1353 = vmatmul.mubr.f32.gmra.mrb[0].mxu0 %v1282
      %v1354 = vpop.f32.mrb[0].mxu0
      %v1355 = vadd.f32 0.0, %v1354
      %v1356 = vpop.f32.mrb[0].mxu0
      %v1357 = vadd.f32 0.0, %v1356
      %1358 = vdwg.mxu0
      %v1367 = vsel %vm561, %v1034, %v1032
      %v1368 = vsel %vm563, %v1036, %v1367
      %v1369 = vsel %vm565, %v1038, %v1368
      %v1370 = vsel %vm561, %v1035, %v1033
      %v1371 = vsel %vm563, %v1037, %v1370
      %v1372 = vsel %vm565, %v1039, %v1371
      %1375 = vmatprep.subr.mxu0 %v1145
      %1376 = vmatpush1.msra.mxu0 %v1144
      %1377 = vmatprep.subr.mxu0 %v1147
      %1378 = vmatpush1.msra.mxu0 %v1146
      %1379 = vmatprep.subr.mxu0 %v1149
      %1380 = vmatpush1.msra.mxu0 %v1148
      %1381 = vmatprep.subr.mxu0 %v1151
      %1382 = vmatpush1.msra.mxu0 %v1150
      %1383 = vmatprep.subr.mxu0 %v1153
      %1384 = vmatpush1.msra.mxu0 %v1152
      %1385 = vmatprep.subr.mxu0 %v1155
      %1386 = vmatpush1.msra.mxu0 %v1154
      %1387 = vmatprep.subr.mxu0 %v1157
      %1388 = vmatpush1.msra.mxu0 %v1156
      %1389 = vmatprep.subr.mxu0 %v1159
      %1390 = vmatpush1.msra.mxu0 %v1158
      %1391 = vmatprep.subr.mxu0 %v1161
      %1392 = vmatpush1.msra.mxu0 %v1160
      %1393 = vmatprep.subr.mxu0 %v1163
      %1394 = vmatpush1.msra.mxu0 %v1162
      %1395 = vmatprep.subr.mxu0 %v1165
      %1396 = vmatpush1.msra.mxu0 %v1164
      %1397 = vmatprep.subr.mxu0 %v1167
      %1398 = vmatpush1.msra.mxu0 %v1166
      %1399 = vmatprep.subr.mxu0 %v1169
      %1400 = vmatpush1.msra.mxu0 %v1168
      %1401 = vmatprep.subr.mxu0 %v1171
      %1402 = vmatpush1.msra.mxu0 %v1170
      %1403 = vmatprep.subr.mxu0 %v1173
      %1404 = vmatpush1.msra.mxu0 %v1172
      %1405 = vmatprep.subr.mxu0 %v1175
      %1406 = vmatpush1.msra.mxu0 %v1174
      %1407 = vmatprep.subr.mxu0 %v1177
      %1408 = vmatpush1.msra.mxu0 %v1176
      %1409 = vmatprep.subr.mxu0 %v1179
      %1410 = vmatpush1.msra.mxu0 %v1178
      %1411 = vmatprep.subr.mxu0 %v1181
      %1412 = vmatpush1.msra.mxu0 %v1180
      %1413 = vmatprep.subr.mxu0 %v1183
      %1414 = vmatpush1.msra.mxu0 %v1182
      %1415 = vmatprep.subr.mxu0 %v1185
      %1416 = vmatpush1.msra.mxu0 %v1184
      %1417 = vmatprep.subr.mxu0 %v1187
      %1418 = vmatpush1.msra.mxu0 %v1186
      %1419 = vmatprep.subr.mxu0 %v1189
      %1420 = vmatpush1.msra.mxu0 %v1188
      %1421 = vmatprep.subr.mxu0 %v1191
      %1422 = vmatpush1.msra.mxu0 %v1190
      %1423 = vmatprep.subr.mxu0 %v1193
      %1424 = vmatpush1.msra.mxu0 %v1192
      %1425 = vmatprep.subr.mxu0 %v1195
      %1426 = vmatpush1.msra.mxu0 %v1194
      %1427 = vmatprep.subr.mxu0 %v1197
      %1428 = vmatpush1.msra.mxu0 %v1196
      %1429 = vmatprep.subr.mxu0 %v1199
      %1430 = vmatpush1.msra.mxu0 %v1198
      %1431 = vmatprep.subr.mxu0 %v1201
      %1432 = vmatpush1.msra.mxu0 %v1200
      %1433 = vmatprep.subr.mxu0 %v1203
      %1434 = vmatpush1.msra.mxu0 %v1202
      %1435 = vmatprep.subr.mxu0 %v1205
      %1436 = vmatpush1.msra.mxu0 %v1204
      %1437 = vmatprep.subr.mxu0 %v1207
      %1438 = vmatpush1.msra.mxu0 %v1206
      %1439 = vmatprep.mubr.f32.mxu0 %v1372
      %1440 = vmatmul.mubr.f32.gmra.mrb[0].mxu0 %v1369
      %v1441 = vpop.f32.mrb[0].mxu0
      %v1442 = vadd.f32 %v1355, %v1441
      %v1443 = vpop.f32.mrb[0].mxu0
      %v1444 = vadd.f32 %v1357, %v1443
      %1445 = vdwg.mxu0
      %v1446 = vld [vmem:[#allocation2] sm:$0x1]
      %v1448 = vlaneseq
      %v1449 = vshrl.u32 %v1448, 7
      %v1450 = vsub.s32 0, %v1449
      %v1451 = vrot.slane %v1446, %v1450
      %1452 = vset.pattern.permute.xlu0 0
      %1453 = vperm.xlu0 %1452, %v1451
      %v1454 = vpop.permute.xlu0 %1453
      %v1456 = vadd.f32 %v1442, %v1454
      %v1457 = vadd.f32 %v1444, %v1454
      %v1458 = vxor.u32 %v1456, 2147483648
      %v1459 = vxor.u32 %v1457, 2147483648
      %v1460 = vmul.f32 %v1458, 1.442695
      %v1461 = vpow.pop %v1460
      %v1462 = vmul.f32 %v1459, 1.442695
      %v1463 = vpow.pop %v1462
      %v1464 = vadd.f32 %v1461, 1.0
      %v1465 = vadd.f32 %v1463, 1.0
      %v1466 = vrcp.pop %v1464
      %v1467 = vmul.f32 1.0, %v1466
      %v1468 = vrcp.pop %v1465
      %v1469 = vmul.f32 1.0, %v1468
      %v1470 = vld [vmem:[%s314] sm:$0xff]
      %v1471 = vld [vmem:[%s314 + $0x8] sm:$0xff]
      %v1472 = vld [vmem:[%s314 + $0x10] sm:$0xff]
      %v1473 = vld [vmem:[%s314 + $0x18] sm:$0xff]
      %v1474 = vld [vmem:[%s314 + $0x20] sm:$0xff]
      %v1475 = vld [vmem:[%s314 + $0x28] sm:$0xff]
      %v1476 = vld [vmem:[%s314 + $0x30] sm:$0xff]
      %v1477 = vld [vmem:[%s314 + $0x38] sm:$0xff]
      %v1478 = vld [vmem:[%s314 + $0x40] sm:$0xff]
      %v1479 = vld [vmem:[%s314 + $0x48] sm:$0xff]
      %v1480 = vld [vmem:[%s314 + $0x50] sm:$0xff]
      %v1481 = vld [vmem:[%s314 + $0x58] sm:$0xff]
      %v1482 = vld [vmem:[%s314 + $0x60] sm:$0xff]
      %v1483 = vld [vmem:[%s314 + $0x68] sm:$0xff]
      %v1484 = vld [vmem:[%s314 + $0x70] sm:$0xff]
      %v1485 = vld [vmem:[%s314 + $0x78] sm:$0xff]
      %v1486 = vld [vmem:[%s314 + $0x80] sm:$0xff]
      %v1487 = vld [vmem:[%s314 + $0x88] sm:$0xff]
      %v1488 = vld [vmem:[%s314 + $0x90] sm:$0xff]
      %v1489 = vld [vmem:[%s314 + $0x98] sm:$0xff]
      %v1490 = vld [vmem:[%s314 + $0xa0] sm:$0xff]
      %v1491 = vld [vmem:[%s314 + $0xa8] sm:$0xff]
      %v1492 = vld [vmem:[%s314 + $0xb0] sm:$0xff]
      %v1493 = vld [vmem:[%s314 + $0xb8] sm:$0xff]
      %v1494 = vld [vmem:[%s314 + $0xc0] sm:$0xff]
      %v1495 = vld [vmem:[%s314 + $0xc8] sm:$0xff]
      %v1496 = vld [vmem:[%s314 + $0xd0] sm:$0xff]
      %v1497 = vld [vmem:[%s314 + $0xd8] sm:$0xff]
      %v1498 = vld [vmem:[%s314 + $0xe0] sm:$0xff]
      %v1499 = vld [vmem:[%s314 + $0xe8] sm:$0xff]
      %v1500 = vld [vmem:[%s314 + $0xf0] sm:$0xff]
      %v1501 = vld [vmem:[%s314 + $0xf8] sm:$0xff]
      %v1504 = vcombine.low %v1467, %v1469
      %v1506 = vunpack.c.l.s4 1966171168
      %v1507 = vunpack.c.0.s8 %v1506
      %v1508 = vlaneseq
      %v1509 = vshrl.u32 %v1508, 7
      %v1510 = vsub.s32 %v1507, %v1509
      %v1511 = vrot.slane %v1504, %v1510
      %v1512 = vcombine.high %v1511, %v1511
      %v1514 = vunpack.c.l.s4 1966171168
      %v1515 = vunpack.c.0.s8 %v1514
      %v1516 = vlaneseq
      %v1517 = vshrl.u32 %v1516, 7
      %v1518 = vsub.s32 %v1515, %v1517
      %v1519 = vrot.slane %v1511, %v1518
      %v1521 = vunpack.c.l.s4 1966171168
      %v1522 = vunpack.c.0.s8 %v1521
      %v1523 = vlaneseq
      %v1524 = vshrl.u32 %v1523, 7
      %v1525 = vsub.s32 %v1522, %v1524
      %v1526 = vrot.slane %v1512, %v1525
      %v1527 = vcombine.high %v1519, %v1519
      %v1528 = vcombine.high %v1526, %v1526
      %v1529 = vlaneseq
      %v1530 = vshrl.u32 %v1529, 7
      %v1531 = vsub.s32 0, %v1530
      %v1532 = vrot.slane %v1519, %v1531
      %v1533 = vlaneseq
      %v1534 = vshrl.u32 %v1533, 7
      %v1535 = vsub.s32 1, %v1534
      %v1536 = vrot.slane %v1519, %v1535
      %v1537 = vlaneseq
      %v1538 = vshrl.u32 %v1537, 7
      %v1539 = vsub.s32 0, %v1538
      %v1540 = vrot.slane %v1526, %v1539
      %v1541 = vlaneseq
      %v1542 = vshrl.u32 %v1541, 7
      %v1543 = vsub.s32 1, %v1542
      %v1544 = vrot.slane %v1526, %v1543
      %v1545 = vlaneseq
      %v1546 = vshrl.u32 %v1545, 7
      %v1547 = vsub.s32 0, %v1546
      %v1548 = vrot.slane %v1527, %v1547
      %v1549 = vlaneseq
      %v1550 = vshrl.u32 %v1549, 7
      %v1551 = vsub.s32 1, %v1550
      %v1552 = vrot.slane %v1527, %v1551
      %v1553 = vlaneseq
      %v1554 = vshrl.u32 %v1553, 7
      %v1555 = vsub.s32 0, %v1554
      %v1556 = vrot.slane %v1528, %v1555
      %v1557 = vlaneseq
      %v1558 = vshrl.u32 %v1557, 7
      %v1559 = vsub.s32 1, %v1558
      %v1560 = vrot.slane %v1528, %v1559
      %v1569 = vmul.f32 %v1470, %v1532
      %v1570 = vmul.f32 %v1471, %v1536
      %v1571 = vmul.f32 %v1472, %v1532
      %v1572 = vmul.f32 %v1473, %v1536
      %v1573 = vmul.f32 %v1474, %v1532
      %v1574 = vmul.f32 %v1475, %v1536
      %v1575 = vmul.f32 %v1476, %v1532
      %v1576 = vmul.f32 %v1477, %v1536
      %v1577 = vmul.f32 %v1478, %v1540
      %v1578 = vmul.f32 %v1479, %v1544
      %v1579 = vmul.f32 %v1480, %v1540
      %v1580 = vmul.f32 %v1481, %v1544
      %v1581 = vmul.f32 %v1482, %v1540
      %v1582 = vmul.f32 %v1483, %v1544
      %v1583 = vmul.f32 %v1484, %v1540
      %v1584 = vmul.f32 %v1485, %v1544
      %v1585 = vmul.f32 %v1486, %v1548
      %v1586 = vmul.f32 %v1487, %v1552
      %v1587 = vmul.f32 %v1488, %v1548
      %v1588 = vmul.f32 %v1489, %v1552
      %v1589 = vmul.f32 %v1490, %v1548
      %v1590 = vmul.f32 %v1491, %v1552
      %v1591 = vmul.f32 %v1492, %v1548
      %v1592 = vmul.f32 %v1493, %v1552
      %v1593 = vmul.f32 %v1494, %v1556
      %v1594 = vmul.f32 %v1495, %v1560
      %v1595 = vmul.f32 %v1496, %v1556
      %v1596 = vmul.f32 %v1497, %v1560
      %v1597 = vmul.f32 %v1498, %v1556
      %v1598 = vmul.f32 %v1499, %v1560
      %v1599 = vmul.f32 %v1500, %v1556
      %v1600 = vmul.f32 %v1501, %v1560
      %1601 = vst [vmem:[%s314] sm:$0xff] %v1569
      %1602 = vst [vmem:[%s314 + $0x8] sm:$0xff] %v1570
      %1603 = vst [vmem:[%s314 + $0x10] sm:$0xff] %v1571
      %1604 = vst [vmem:[%s314 + $0x18] sm:$0xff] %v1572
      %1605 = vst [vmem:[%s314 + $0x20] sm:$0xff] %v1573
      %1606 = vst [vmem:[%s314 + $0x28] sm:$0xff] %v1574
      %1607 = vst [vmem:[%s314 + $0x30] sm:$0xff] %v1575
      %1608 = vst [vmem:[%s314 + $0x38] sm:$0xff] %v1576
      %1609 = vst [vmem:[%s314 + $0x40] sm:$0xff] %v1577
      %1610 = vst [vmem:[%s314 + $0x48] sm:$0xff] %v1578
      %1611 = vst [vmem:[%s314 + $0x50] sm:$0xff] %v1579
      %1612 = vst [vmem:[%s314 + $0x58] sm:$0xff] %v1580
      %1613 = vst [vmem:[%s314 + $0x60] sm:$0xff] %v1581
      %1614 = vst [vmem:[%s314 + $0x68] sm:$0xff] %v1582
      %1615 = vst [vmem:[%s314 + $0x70] sm:$0xff] %v1583
      %1616 = vst [vmem:[%s314 + $0x78] sm:$0xff] %v1584
      %1617 = vst [vmem:[%s314 + $0x80] sm:$0xff] %v1585
      %1618 = vst [vmem:[%s314 + $0x88] sm:$0xff] %v1586
      %1619 = vst [vmem:[%s314 + $0x90] sm:$0xff] %v1587
      %1620 = vst [vmem:[%s314 + $0x98] sm:$0xff] %v1588
      %1621 = vst [vmem:[%s314 + $0xa0] sm:$0xff] %v1589
      %1622 = vst [vmem:[%s314 + $0xa8] sm:$0xff] %v1590
      %1623 = vst [vmem:[%s314 + $0xb0] sm:$0xff] %v1591
      %1624 = vst [vmem:[%s314 + $0xb8] sm:$0xff] %v1592
      %1625 = vst [vmem:[%s314 + $0xc0] sm:$0xff] %v1593
      %1626 = vst [vmem:[%s314 + $0xc8] sm:$0xff] %v1594
      %1627 = vst [vmem:[%s314 + $0xd0] sm:$0xff] %v1595
      %1628 = vst [vmem:[%s314 + $0xd8] sm:$0xff] %v1596
      %1629 = vst [vmem:[%s314 + $0xe0] sm:$0xff] %v1597
      %1630 = vst [vmem:[%s314 + $0xe8] sm:$0xff] %v1598
      %1631 = vst [vmem:[%s314 + $0xf0] sm:$0xff] %v1599
      %1632 = vst [vmem:[%s314 + $0xf8] sm:$0xff] %v1600
      %s1633 = smul.u32 4, %s21
      %p1634 = scmp.lt.s32.totalorder %s1633, 7
      %s1635 = scalar_select %p1634, %s1633, 7
      %s1636 = smul.addr %s1635, 8
      %s1637 = smul.addr %s1636, 8
      %s1638 = scalar_lea.vmem %s8, %s1637
      // Predicated region
      $region53: #{cbam.1} parent=51 // pred_check
        %p1639 = pneg %p212
      $region54: #{cbam.1} parent=51 // pred_check_branch
        %1641 = sbr.rel (%p1639) target = $region56
      $region55: #{cbam.1} parent=51 // pred_region
        %s1642 = smul.u32 4, %s21
      $region56: #{cbam.1} parent=51 // pred_fallthru
        _
    $region52: #{cbam.1} parent=5 // pred_fallthru
      _
    %p1643 = scmp.le.s32.totalorder 2, %s16
    // Predicated region
    $region57: #{cbam.1} parent=5 // pred_check
      %p1644 = pneg %p1643
    $region58: #{cbam.1} parent=5 // pred_check_branch
      %1646 = sbr.rel (%p1644) target = $region60
    $region59: #{cbam.1} parent=5 // pred_region
      %s1647 = ssub.s32 %s16, 2
      // Predicated region
      $region61: #{cbam.1} parent=59 // pred_check
        %p1648 = pneg %p218
      $region62: #{cbam.1} parent=59 // pred_check_branch
        %1650 = sbr.rel (%p1648) target = $region64
      $region63: #{cbam.1} parent=59 // pred_region
        %s1651 = smul.u32 4, %s22
        %p1652 = scmp.lt.s32.totalorder %s1651, 7
        %s1653 = scalar_select %p1652, %s1651, 7
        %s1654 = smul.addr %s1653, 8
        %s1655 = smul.addr %s1654, 8
        %s1656 = scalar_lea.vmem %s8, %s1655
      $region64: #{cbam.1} parent=59 // pred_fallthru
        _
    $region60: #{cbam.1} parent=5 // pred_fallthru
      _
  $region6: #{cbam.1} parent=0 // loop_footer
    %s20 = sadd.s32 1, %s16
  $region7: #{cbam.1} parent=0 // loop_footer_branch
    %15 = sbr.rel target = $region3
  $region8: #{cbam.1} parent=0 // loop_exit
    _

</llo_original>
